<compile_context>
chip_gen: v6e
topology: v6e:2x2x1
jax: 0.10.0
libtpu: 0.0.40
codegen_flags: <defaults>
</compile_context>

<pallas_src>
import functools
import math

import jax
import jax.numpy as jnp
from jax import lax
from jax.experimental import pallas as pl
from jax.experimental.pallas import tpu as pltpu


def _flash_cross_attn_kernel(q_ref, kv_ref, o_ref, m_ref, l_ref, acc_ref, *,
                             nheads, nheads_kv, head_dim, scale, causal,
                             skq_offset, sk_valid, bf16_softmax):
    """One (batch, q-tile, kv-tile) grid step.

    q_ref  : (1, Tq, H*D)        lane-packed query heads
    kv_ref : (1, Tk, 2*Hk*D)     lane-packed [k heads | v heads]
    o_ref  : (1, Tq, H*D)        lane-dense output block
    m_ref, l_ref : (H, Tq, 1) f32 online-softmax state
    acc_ref      : (H, Tq, D) f32 unnormalized output accumulator
    """
    qi = pl.program_id(1)
    ki = pl.program_id(2)
    nk = pl.num_programs(2)
    tq = q_ref.shape[1]
    tk = kv_ref.shape[1]
    D = head_dim
    group = nheads // nheads_kv

    @pl.when(ki == 0)
    def _init():
        m_ref[...] = jnp.full(m_ref.shape, -jnp.inf, dtype=m_ref.dtype)
        l_ref[...] = jnp.zeros(l_ref.shape, dtype=l_ref.dtype)
        acc_ref[...] = jnp.zeros(acc_ref.shape, dtype=acc_ref.dtype)

    def process_block(apply_causal_mask, apply_pad_mask):
        cmask = None
        pmask = None
        if apply_causal_mask:
            row = lax.broadcasted_iota(jnp.int32, (tq, tk), 0) + qi * tq
            col = lax.broadcasted_iota(jnp.int32, (tq, tk), 1) + ki * tk
            cmask = col > row + skq_offset          # True -> mask out
        if apply_pad_mask:
            col = lax.broadcasted_iota(jnp.int32, (tq, tk), 1) + ki * tk
            pmask = col >= sk_valid                 # padded keys -> weight 0

        for g in range(nheads_kv):
            # Static Ref slices are zero-cost views; only (Tk,D)/(Tq,D) values
            # are ever live.  K/V loaded once per KV group, reused by q-heads.
            kh = kv_ref[0, :, g * D:(g + 1) * D]
            vh = kv_ref[0, :, (nheads_kv + g) * D:(nheads_kv + g + 1) * D]
            for j in range(group):
                h = g * group + j
                # Fold the softmax scale into the small (Tq,D) q operand
                # (same dtype class as the reference's `k * softmax_scale`).
                qh = q_ref[0, :, h * D:(h + 1) * D] * scale
                s = lax.dot_general(
                    qh, kh, dimension_numbers=(((1,), (1,)), ((), ())),
                    preferred_element_type=jnp.float32)          # (Tq,Tk) f32
                if apply_causal_mask:
                    s = jnp.where(cmask, -10000.0, s)   # ref masked_fill value
                if apply_pad_mask:
                    s = jnp.where(pmask, -1e30, s)

                m_prev = m_ref[h]                                   # (Tq, 1)
                m_new = jnp.maximum(m_prev, jnp.max(s, axis=-1, keepdims=True))
                alpha = jnp.exp(m_prev - m_new)
                if bf16_softmax:
                    # bf16 exp + bf16 PV operand (no separate (Tq,Tk) cast);
                    # l accumulates in f32.
                    p = jnp.exp((s - m_new).astype(jnp.bfloat16))
                else:
                    p = jnp.exp(s - m_new)
                l_ref[h] = alpha * l_ref[h] + jnp.sum(
                    p, axis=-1, keepdims=True, dtype=jnp.float32)
                p_mm = p if p.dtype == vh.dtype else p.astype(vh.dtype)
                acc_ref[h] = alpha * acc_ref[h] + jnp.dot(
                    p_mm, vh, preferred_element_type=jnp.float32)
                m_ref[h] = m_new

    kv_padded = (nk * tk) != sk_valid   # static: wrapper padded Sk

    if causal:
        if skq_offset >= 0:
            # Padded key columns are already excluded by the causal mask for
            # every valid query row, so no separate pad mask is needed here.
            row0 = qi * tq
            col0 = ki * tk
            live = col0 <= row0 + (tq - 1) + skq_offset   # block not fully masked
            diag = col0 + (tk - 1) > row0 + skq_offset    # block straddles diagonal

            @pl.when(jnp.logical_and(live, diag))
            def _diag_block():
                process_block(True, False)

            @pl.when(jnp.logical_and(live, jnp.logical_not(diag)))
            def _interior_block():
                process_block(False, False)
        else:
            # Sq > Sk: rows with no valid keys get uniform attention (same
            # garbage-in behavior as the reference's all -10000 softmax), so
            # keep the reference semantics and don't skip blocks.
            process_block(True, False)
    else:
        if kv_padded:
            is_last = ki == nk - 1

            @pl.when(is_last)
            def _last_block():
                process_block(False, True)

            @pl.when(jnp.logical_not(is_last))
            def _inner_block():
                process_block(False, False)
        else:
            process_block(False, False)

    @pl.when(ki == nk - 1)
    def _finalize():
        for h in range(nheads):
            l = l_ref[h]
            inv = pl.reciprocal(l, approx=True)     # EUP slot
            inv = inv * (2.0 - l * inv)             # one Newton step (cheap)
            # Per-head store: live set stays one (Tq,D) tile, output block is
            # still lane-dense (H*D lanes).
            o_ref[0, :, h * D:(h + 1) * D] = (acc_ref[h] * inv).astype(o_ref.dtype)


def _round_up(x, m):
    return ((x + m - 1) // m) * m


def _pick_tile(dim, target):
    """dim is a multiple of 128 (padded); pick the largest friendly tile <= target."""
    target = max(8, min(int(target), dim))
    for t in (target, 1024, 512, 256, 128, 64, 32, 16, 8):
        if t <= target and dim % t == 0:
            return t
    return dim


def cross_attention(q, kv, *, causal=False, softmax_scale=None,
                    block_q=None, block_k=None, bf16_softmax=None):
    """CrossAttention.forward (eval mode, no key_padding_mask).

    q:  (B, Sq, H, D)
    kv: (B, Sk, 2, Hk, D) with H % Hk == 0 (GQA repeat handled in-kernel)
    returns (B, Sq, H, D)
    """
    B, Sq, H, D = q.shape
    Bk, Sk, two, Hk, Dk = kv.shape
    assert two == 2 and Bk == B and Dk == D and H % Hk == 0
    scale = float(softmax_scale) if softmax_scale is not None else 1.0 / math.sqrt(D)

    # Trace-time hardware query; fall back to the smallest (v7x, 64 MiB) budget.
    try:
        vmem_cap = int(pltpu.get_tpu_info().vmem_capacity_bytes)
    except Exception:
        vmem_cap = 64 * 1024 * 1024
    big_vmem = vmem_cap >= 100 * 1024 * 1024        # 128 MiB parts (v5e/v6e)
    if block_q is None:
        block_q = 512 if big_vmem else 256
    if block_k is None:
        block_k = 512 if big_vmem else 256
    if bf16_softmax is None:
        # bf16 exp relieves the EUP/VPU slots on v6e/v7x; pass False on v5e.
        bf16_softmax = (q.dtype == jnp.bfloat16)

    # Pad sequences to multiples of 128 so tiles stay pipeline/MXU friendly;
    # padded keys are masked in-kernel, padded query rows are sliced off.
    Sq_pad = _round_up(Sq, 128)
    Sk_pad = _round_up(Sk, 128)
    tq = _pick_tile(Sq_pad, block_q)
    tk = _pick_tile(Sk_pad, block_k)
    nq, nk = Sq_pad // tq, Sk_pad // tk

    hd = H * D
    kvd = 2 * Hk * D
    # Free reshapes (contiguous): heads stay lane-packed, no HBM transposes.
    q2 = q.reshape(B, Sq, hd)
    kv2 = kv.reshape(B, Sk, kvd)
    if Sq_pad != Sq:
        q2 = jnp.pad(q2, ((0, 0), (0, Sq_pad - Sq), (0, 0)))
    if Sk_pad != Sk:
        kv2 = jnp.pad(kv2, ((0, 0), (0, Sk_pad - Sk), (0, 0)))

    kernel = functools.partial(
        _flash_cross_attn_kernel,
        nheads=H, nheads_kv=Hk, head_dim=D, scale=scale,
        causal=bool(causal), skq_offset=Sk - Sq, sk_valid=Sk,
        bf16_softmax=bool(bf16_softmax))

    itemsize = jnp.dtype(q.dtype).itemsize
    cost = pl.CostEstimate(
        flops=4 * B * H * Sq_pad * Sk_pad * D,
        transcendentals=B * H * Sq_pad * Sk_pad,
        bytes_accessed=(q2.size + kv2.size + B * Sq_pad * hd) * itemsize,
    )

    # VMEM budget: double-buffered blocks + lane-padded scratch (m/l pad to
    # 128 lanes, acc pads D up to 128).  Only raise the scoped limit when the
    # tiles need it, and clamp below the physical VMEM of this chip (64 MiB
    # on v7x).
    lane = 128
    blk_bytes = 2 * (tq * hd + tk * kvd + tq * hd) * itemsize
    scratch_bytes = H * tq * (2 * lane + _round_up(D, lane)) * 4
    est = blk_bytes + scratch_bytes
    vmem_limit = None
    if est > 12 * 1024 * 1024:
        vmem_limit = int(min(max(2 * est, 32 * 1024 * 1024),
                             int(vmem_cap * 0.75)))

    out = pl.pallas_call(
        kernel,
        out_shape=jax.ShapeDtypeStruct((B, Sq_pad, hd), q.dtype),
        grid_spec=pltpu.PrefetchScalarGridSpec(
            num_scalar_prefetch=0,
            grid=(B, nq, nk),                       # KV (reduction) axis last
            in_specs=[
                pl.BlockSpec((1, tq, hd), lambda b, qi, ki: (b, qi, 0)),
                pl.BlockSpec((1, tk, kvd), lambda b, qi, ki: (b, ki, 0)),
            ],
            out_specs=pl.BlockSpec((1, tq, hd), lambda b, qi, ki: (b, qi, 0)),
            scratch_shapes=[
                pltpu.VMEM((H, tq, 1), jnp.float32),   # m
                pltpu.VMEM((H, tq, 1), jnp.float32),   # l
                pltpu.VMEM((H, tq, D), jnp.float32),   # acc
            ],
        ),
        compiler_params=pltpu.CompilerParams(
            dimension_semantics=("parallel", "parallel", "arbitrary"),
            vmem_limit_bytes=vmem_limit,
        ),
        cost_estimate=cost,
    )(q2, kv2)

    if Sq_pad != Sq:
        out = out[:, :Sq]
    return out.reshape(B, Sq, H, D)
    # TODO(synk): key_padding_mask and attention_dropout (p=0 in eval) are not
    # implemented; module defaults (None / eval) are reproduced.


def _reference(q, kv, causal=False, softmax_scale=None):
    B, Sq, H, D = q.shape
    Sk, Hk = kv.shape[1], kv.shape[3]
    scale = softmax_scale if softmax_scale is not None else 1.0 / math.sqrt(D)
    k = kv[:, :, 0].astype(jnp.float32)
    v = kv[:, :, 1].astype(jnp.float32)
    if Hk != H:
        g = H // Hk
        k = jnp.repeat(k, g, axis=2)
        v = jnp.repeat(v, g, axis=2)
    s = jnp.einsum("bthd,bshd->bhts", q.astype(jnp.float32), k) * scale
    if causal:
        row = jnp.arange(Sq)[:, None]
        col = jnp.arange(Sk)[None, :]
        s = jnp.where(col > row + (Sk - Sq), -10000.0, s)
    p = jax.nn.softmax(s, axis=-1)
    o = jnp.einsum("bhts,bshd->bthd", p, v)
    return o.astype(q.dtype)


if __name__ == "__main__":
    key = jax.random.PRNGKey(0)
    k1, k2, k3, k4, k5, k6 = jax.random.split(key, 6)

    # 1) Non-causal MHA, small blocks so several KV tiles exercise the online
    #    softmax accumulation.
    B, Sq, Sk, H, D = 2, 128, 128, 2, 64
    q = jax.random.normal(k1, (B, Sq, H, D), dtype=jnp.float32)
    kv = jax.random.normal(k2, (B, Sk, 2, H, D), dtype=jnp.float32)
    out = jax.block_until_ready(cross_attention(q, kv, block_q=64, block_k=64))
    assert out.shape == (B, Sq, H, D), out.shape
    ref = _reference(q, kv)
    err = float(jnp.max(jnp.abs(out.astype(jnp.float32) - ref.astype(jnp.float32))))
    assert err < 2e-3, f"non-causal max abs err {err}"

    # 2) Causal, multiple q and kv tiles (exercises fully-masked block skip and
    #    diagonal/interior dispatch).
    out_c = jax.block_until_ready(
        cross_attention(q, kv, causal=True, block_q=64, block_k=64))
    ref_c = _reference(q, kv, causal=True)
    err_c = float(jnp.max(jnp.abs(out_c.astype(jnp.float32) - ref_c.astype(jnp.float32))))
    assert err_c < 2e-3, f"causal max abs err {err_c}"

    # 3) GQA + non-128-multiple lengths (padding + key-padding mask), non-causal.
    Bg, Sqg, Skg, Hg, Hkg, Dg = 1, 100, 72, 4, 2, 64
    qg = jax.random.normal(k3, (Bg, Sqg, Hg, Dg), dtype=jnp.float32)
    kvg = jax.random.normal(k4, (Bg, Skg, 2, Hkg, Dg), dtype=jnp.float32)
    out_g = jax.block_until_ready(cross_attention(qg, kvg, block_q=64, block_k=64))
    ref_g = _reference(qg, kvg)
    err_g = float(jnp.max(jnp.abs(out_g.astype(jnp.float32) - ref_g.astype(jnp.float32))))
    assert err_g < 2e-3, f"gqa/padded max abs err {err_g}"

    # 4) Causal GQA with Sq < Sk and padded lengths, bf16 inputs (exercises the
    #    bf16-softmax path, auto-enabled for bf16; pass bf16_softmax=False on v5e).
    Bb, Sqb, Skb, Hb, Hkb, Db = 1, 64, 100, 4, 2, 64
    qb = jax.random.normal(k5, (Bb, Sqb, Hb, Db), dtype=jnp.bfloat16)
    kvb = jax.random.normal(k6, (Bb, Skb, 2, Hkb, Db), dtype=jnp.bfloat16)
    out_b = jax.block_until_ready(
        cross_attention(qb, kvb, causal=True, block_q=64, block_k=64))
    ref_b = _reference(qb, kvb, causal=True)
    err_b = float(jnp.max(jnp.abs(out_b.astype(jnp.float32) - ref_b.astype(jnp.float32))))
    assert err_b < 8e-2, f"causal bf16 gqa max abs err {err_b}"

    print("KERNEL_OK")
</pallas_src>

<mosaic_0001>
module attributes {stable_mosaic.version = 11 : i64} {
  func.func @_flash_cross_attn_kernel(%arg0: i32, %arg1: i32, %arg2: i32, %arg3: memref<1x64x128xf32, #tpu.memory_space<vmem>>, %arg4: memref<1x64x256xf32, #tpu.memory_space<vmem>>, %arg5: memref<1x64x128xf32, #tpu.memory_space<vmem>>, %arg6: memref<2x64x1xf32, #tpu.memory_space<vmem>>, %arg7: memref<2x64x1xf32, #tpu.memory_space<vmem>>, %arg8: memref<2x64x64xf32, #tpu.memory_space<vmem>>) attributes {dimension_semantics = [#tpu.dimension_semantics<parallel>, #tpu.dimension_semantics<parallel>, #tpu.dimension_semantics<arbitrary>], iteration_bounds = array<i64: 2, 2, 2>, scalar_prefetch = 0 : i64, scratch_operands = 3 : i64, tpu.core_type = #tpu.core_type<tc>, window_params = [{transform_indices = @transform_0, window_bounds = array<i64: 1, 64, 128>}, {transform_indices = @transform_1, window_bounds = array<i64: 1, 64, 256>}, {transform_indices = @transform_2, window_bounds = array<i64: 1, 64, 128>}]} {
    %c0_i32 = arith.constant 0 : i32
    %0 = arith.cmpi eq, %arg2, %c0_i32 : i32
    %1 = arith.extui %0 : i1 to i32
    %c0_i32_0 = arith.constant 0 : i32
    %2 = arith.cmpi ne, %1, %c0_i32_0 : i32
    scf.if %2 {
      %cst_60 = arith.constant 0xFF800000 : f32
      %86 = vector.broadcast %cst_60 : f32 to vector<2x64x1xf32>
      %c0_61 = arith.constant 0 : index
      %c0_62 = arith.constant 0 : index
      %c0_63 = arith.constant 0 : index
      %87 = vector.load %arg6[%c0_61, %c0_62, %c0_63] : memref<2x64x1xf32, #tpu.memory_space<vmem>>, vector<2x64x1xf32>
      tpu.vector_store %arg6[%c0_61, %c0_62, %c0_63], %86 {strides = array<i32>} : memref<2x64x1xf32, #tpu.memory_space<vmem>>, vector<2x64x1xf32>,
      %cst_64 = arith.constant 0.000000e+00 : f32
      %88 = vector.broadcast %cst_64 : f32 to vector<2x64x1xf32>
      %c0_65 = arith.constant 0 : index
      %c0_66 = arith.constant 0 : index
      %c0_67 = arith.constant 0 : index
      %89 = vector.load %arg7[%c0_65, %c0_66, %c0_67] : memref<2x64x1xf32, #tpu.memory_space<vmem>>, vector<2x64x1xf32>
      tpu.vector_store %arg7[%c0_65, %c0_66, %c0_67], %88 {strides = array<i32>} : memref<2x64x1xf32, #tpu.memory_space<vmem>>, vector<2x64x1xf32>,
      %cst_68 = arith.constant 0.000000e+00 : f32
      %90 = vector.broadcast %cst_68 : f32 to vector<2x64x64xf32>
      %c0_69 = arith.constant 0 : index
      %c0_70 = arith.constant 0 : index
      %c0_71 = arith.constant 0 : index
      %91 = vector.load %arg8[%c0_69, %c0_70, %c0_71] : memref<2x64x64xf32, #tpu.memory_space<vmem>>, vector<2x64x64xf32>
      tpu.vector_store %arg8[%c0_69, %c0_70, %c0_71], %90 {strides = array<i32>} : memref<2x64x64xf32, #tpu.memory_space<vmem>>, vector<2x64x64xf32>,
    } else {
    }
    %c0 = arith.constant 0 : index
    %c0_1 = arith.constant 0 : index
    %c0_2 = arith.constant 0 : index
    %3 = vector.load %arg4[%c0, %c0_1, %c0_2] : memref<1x64x256xf32, #tpu.memory_space<vmem>>, vector<1x64x64xf32>
    %4 = vector.shape_cast %3 : vector<1x64x64xf32> to vector<64x64xf32>
    %c0_3 = arith.constant 0 : index
    %c0_4 = arith.constant 0 : index
    %c128 = arith.constant 128 : index
    %5 = vector.load %arg4[%c0_3, %c0_4, %c128] : memref<1x64x256xf32, #tpu.memory_space<vmem>>, vector<1x64x64xf32>
    %6 = vector.shape_cast %5 : vector<1x64x64xf32> to vector<64x64xf32>
    %c0_5 = arith.constant 0 : index
    %c0_6 = arith.constant 0 : index
    %c0_7 = arith.constant 0 : index
    %7 = vector.load %arg3[%c0_5, %c0_6, %c0_7] : memref<1x64x128xf32, #tpu.memory_space<vmem>>, vector<1x64x64xf32>
    %8 = vector.shape_cast %7 : vector<1x64x64xf32> to vector<64x64xf32>
    %cst = arith.constant 1.250000e-01 : f32
    %9 = vector.broadcast %cst : f32 to vector<64x64xf32>
    %10 = arith.mulf %8, %9 : vector<64x64xf32>
    %cst_8 = arith.constant dense<0.000000e+00> : vector<64x64xf32>
    %11 = tpu.matmul %10, %4, %cst_8 {dimension_numbers = #tpu.dot_dimension_numbers<[1], [1], [0], [0], [0, 0, 1, 0], [], []>} : vector<64x64xf32>, vector<64x64xf32>, vector<64x64xf32> -> vector<64x64xf32>
    %c0_9 = arith.constant 0 : index
    %c0_10 = arith.constant 0 : index
    %c0_11 = arith.constant 0 : index
    %12 = vector.load %arg6[%c0_9, %c0_10, %c0_11] : memref<2x64x1xf32, #tpu.memory_space<vmem>>, vector<1x64x1xf32>
    %13 = vector.shape_cast %12 : vector<1x64x1xf32> to vector<64x1xf32>
    %cst_12 = arith.constant dense<0xFF800000> : vector<64xf32>
    %14 = vector.multi_reduction <maximumf>, %11, %cst_12 [1] : vector<64x64xf32> to vector<64xf32>
    %15 = vector.shape_cast %14 : vector<64xf32> to vector<64x1xf32>
    %16 = arith.maximumf %13, %15 : vector<64x1xf32>
    %17 = arith.subf %13, %16 : vector<64x1xf32>
    %18 = math.exp %17 : vector<64x1xf32>
    %19 = vector.broadcast %16 : vector<64x1xf32> to vector<64x64xf32>
    %20 = arith.subf %11, %19 : vector<64x64xf32>
    %21 = math.exp %20 : vector<64x64xf32>
    %c0_13 = arith.constant 0 : index
    %c0_14 = arith.constant 0 : index
    %c0_15 = arith.constant 0 : index
    %22 = vector.load %arg7[%c0_13, %c0_14, %c0_15] : memref<2x64x1xf32, #tpu.memory_space<vmem>>, vector<1x64x1xf32>
    %23 = vector.shape_cast %22 : vector<1x64x1xf32> to vector<64x1xf32>
    %24 = arith.mulf %18, %23 : vector<64x1xf32>
    %cst_16 = arith.constant dense<0.000000e+00> : vector<64xf32>
    %25 = vector.multi_reduction <add>, %21, %cst_16 [1] : vector<64x64xf32> to vector<64xf32>
    %26 = vector.shape_cast %25 : vector<64xf32> to vector<64x1xf32>
    %27 = arith.addf %24, %26 : vector<64x1xf32>
    %c0_17 = arith.constant 0 : index
    %c0_18 = arith.constant 0 : index
    %c0_19 = arith.constant 0 : index
    %28 = vector.load %arg7[%c0_17, %c0_18, %c0_19] : memref<2x64x1xf32, #tpu.memory_space<vmem>>, vector<1x64x1xf32>
    %29 = vector.shape_cast %28 : vector<1x64x1xf32> to vector<64x1xf32>
    %30 = vector.shape_cast %27 : vector<64x1xf32> to vector<1x64x1xf32>
    tpu.vector_store %arg7[%c0_17, %c0_18, %c0_19], %30 {strides = array<i32>} : memref<2x64x1xf32, #tpu.memory_space<vmem>>, vector<1x64x1xf32>,
    %c0_20 = arith.constant 0 : index
    %c0_21 = arith.constant 0 : index
    %c0_22 = arith.constant 0 : index
    %31 = vector.load %arg8[%c0_20, %c0_21, %c0_22] : memref<2x64x64xf32, #tpu.memory_space<vmem>>, vector<1x64x64xf32>
    %32 = vector.shape_cast %31 : vector<1x64x64xf32> to vector<64x64xf32>
    %33 = vector.broadcast %18 : vector<64x1xf32> to vector<64x64xf32>
    %34 = arith.mulf %33, %32 : vector<64x64xf32>
    %cst_23 = arith.constant dense<0.000000e+00> : vector<64x64xf32>
    %35 = tpu.matmul %21, %6, %cst_23 {dimension_numbers = #tpu.dot_dimension_numbers<[1], [0], [0], [1], [0, 0, 1, 1], [], []>} : vector<64x64xf32>, vector<64x64xf32>, vector<64x64xf32> -> vector<64x64xf32>
    %36 = arith.addf %34, %35 : vector<64x64xf32>
    %c0_24 = arith.constant 0 : index
    %c0_25 = arith.constant 0 : index
    %c0_26 = arith.constant 0 : index
    %37 = vector.load %arg8[%c0_24, %c0_25, %c0_26] : memref<2x64x64xf32, #tpu.memory_space<vmem>>, vector<1x64x64xf32>
    %38 = vector.shape_cast %37 : vector<1x64x64xf32> to vector<64x64xf32>
    %39 = vector.shape_cast %36 : vector<64x64xf32> to vector<1x64x64xf32>
    tpu.vector_store %arg8[%c0_24, %c0_25, %c0_26], %39 {strides = array<i32>} : memref<2x64x64xf32, #tpu.memory_space<vmem>>, vector<1x64x64xf32>,
    %c0_27 = arith.constant 0 : index
    %c0_28 = arith.constant 0 : index
    %c0_29 = arith.constant 0 : index
    %40 = vector.load %arg6[%c0_27, %c0_28, %c0_29] : memref<2x64x1xf32, #tpu.memory_space<vmem>>, vector<1x64x1xf32>
    %41 = vector.shape_cast %40 : vector<1x64x1xf32> to vector<64x1xf32>
    %42 = vector.shape_cast %16 : vector<64x1xf32> to vector<1x64x1xf32>
    tpu.vector_store %arg6[%c0_27, %c0_28, %c0_29], %42 {strides = array<i32>} : memref<2x64x1xf32, #tpu.memory_space<vmem>>, vector<1x64x1xf32>,
    %c0_30 = arith.constant 0 : index
    %c0_31 = arith.constant 0 : index
    %c64 = arith.constant 64 : index
    %43 = vector.load %arg4[%c0_30, %c0_31, %c64] : memref<1x64x256xf32, #tpu.memory_space<vmem>>, vector<1x64x64xf32>
    %44 = vector.shape_cast %43 : vector<1x64x64xf32> to vector<64x64xf32>
    %c0_32 = arith.constant 0 : index
    %c0_33 = arith.constant 0 : index
    %c192 = arith.constant 192 : index
    %45 = vector.load %arg4[%c0_32, %c0_33, %c192] : memref<1x64x256xf32, #tpu.memory_space<vmem>>, vector<1x64x64xf32>
    %46 = vector.shape_cast %45 : vector<1x64x64xf32> to vector<64x64xf32>
    %c0_34 = arith.constant 0 : index
    %c0_35 = arith.constant 0 : index
    %c64_36 = arith.constant 64 : index
    %47 = vector.load %arg3[%c0_34, %c0_35, %c64_36] : memref<1x64x128xf32, #tpu.memory_space<vmem>>, vector<1x64x64xf32>
    %48 = vector.shape_cast %47 : vector<1x64x64xf32> to vector<64x64xf32>
    %cst_37 = arith.constant 1.250000e-01 : f32
    %49 = vector.broadcast %cst_37 : f32 to vector<64x64xf32>
    %50 = arith.mulf %48, %49 : vector<64x64xf32>
    %cst_38 = arith.constant dense<0.000000e+00> : vector<64x64xf32>
    %51 = tpu.matmul %50, %44, %cst_38 {dimension_numbers = #tpu.dot_dimension_numbers<[1], [1], [0], [0], [0, 0, 1, 0], [], []>} : vector<64x64xf32>, vector<64x64xf32>, vector<64x64xf32> -> vector<64x64xf32>
    %c1 = arith.constant 1 : index
    %c0_39 = arith.constant 0 : index
    %c0_40 = arith.constant 0 : index
    %52 = vector.load %arg6[%c1, %c0_39, %c0_40] : memref<2x64x1xf32, #tpu.memory_space<vmem>>, vector<1x64x1xf32>
    %53 = vector.shape_cast %52 : vector<1x64x1xf32> to vector<64x1xf32>
    %cst_41 = arith.constant dense<0xFF800000> : vector<64xf32>
    %54 = vector.multi_reduction <maximumf>, %51, %cst_41 [1] : vector<64x64xf32> to vector<64xf32>
    %55 = vector.shape_cast %54 : vector<64xf32> to vector<64x1xf32>
    %56 = arith.maximumf %53, %55 : vector<64x1xf32>
    %57 = arith.subf %53, %56 : vector<64x1xf32>
    %58 = math.exp %57 : vector<64x1xf32>
    %59 = vector.broadcast %56 : vector<64x1xf32> to vector<64x64xf32>
    %60 = arith.subf %51, %59 : vector<64x64xf32>
    %61 = math.exp %60 : vector<64x64xf32>
    %c1_42 = arith.constant 1 : index
    %c0_43 = arith.constant 0 : index
    %c0_44 = arith.constant 0 : index
    %62 = vector.load %arg7[%c1_42, %c0_43, %c0_44] : memref<2x64x1xf32, #tpu.memory_space<vmem>>, vector<1x64x1xf32>
    %63 = vector.shape_cast %62 : vector<1x64x1xf32> to vector<64x1xf32>
    %64 = arith.mulf %58, %63 : vector<64x1xf32>
    %cst_45 = arith.constant dense<0.000000e+00> : vector<64xf32>
    %65 = vector.multi_reduction <add>, %61, %cst_45 [1] : vector<64x64xf32> to vector<64xf32>
    %66 = vector.shape_cast %65 : vector<64xf32> to vector<64x1xf32>
    %67 = arith.addf %64, %66 : vector<64x1xf32>
    %c1_46 = arith.constant 1 : index
    %c0_47 = arith.constant 0 : index
    %c0_48 = arith.constant 0 : index
    %68 = vector.load %arg7[%c1_46, %c0_47, %c0_48] : memref<2x64x1xf32, #tpu.memory_space<vmem>>, vector<1x64x1xf32>
    %69 = vector.shape_cast %68 : vector<1x64x1xf32> to vector<64x1xf32>
    %70 = vector.shape_cast %67 : vector<64x1xf32> to vector<1x64x1xf32>
    tpu.vector_store %arg7[%c1_46, %c0_47, %c0_48], %70 {strides = array<i32>} : memref<2x64x1xf32, #tpu.memory_space<vmem>>, vector<1x64x1xf32>,
    %c1_49 = arith.constant 1 : index
    %c0_50 = arith.constant 0 : index
    %c0_51 = arith.constant 0 : index
    %71 = vector.load %arg8[%c1_49, %c0_50, %c0_51] : memref<2x64x64xf32, #tpu.memory_space<vmem>>, vector<1x64x64xf32>
    %72 = vector.shape_cast %71 : vector<1x64x64xf32> to vector<64x64xf32>
    %73 = vector.broadcast %58 : vector<64x1xf32> to vector<64x64xf32>
    %74 = arith.mulf %73, %72 : vector<64x64xf32>
    %cst_52 = arith.constant dense<0.000000e+00> : vector<64x64xf32>
    %75 = tpu.matmul %61, %46, %cst_52 {dimension_numbers = #tpu.dot_dimension_numbers<[1], [0], [0], [1], [0, 0, 1, 1], [], []>} : vector<64x64xf32>, vector<64x64xf32>, vector<64x64xf32> -> vector<64x64xf32>
    %76 = arith.addf %74, %75 : vector<64x64xf32>
    %c1_53 = arith.constant 1 : index
    %c0_54 = arith.constant 0 : index
    %c0_55 = arith.constant 0 : index
    %77 = vector.load %arg8[%c1_53, %c0_54, %c0_55] : memref<2x64x64xf32, #tpu.memory_space<vmem>>, vector<1x64x64xf32>
    %78 = vector.shape_cast %77 : vector<1x64x64xf32> to vector<64x64xf32>
    %79 = vector.shape_cast %76 : vector<64x64xf32> to vector<1x64x64xf32>
    tpu.vector_store %arg8[%c1_53, %c0_54, %c0_55], %79 {strides = array<i32>} : memref<2x64x64xf32, #tpu.memory_space<vmem>>, vector<1x64x64xf32>,
    %c1_56 = arith.constant 1 : index
    %c0_57 = arith.constant 0 : index
    %c0_58 = arith.constant 0 : index
    %80 = vector.load %arg6[%c1_56, %c0_57, %c0_58] : memref<2x64x1xf32, #tpu.memory_space<vmem>>, vector<1x64x1xf32>
    %81 = vector.shape_cast %80 : vector<1x64x1xf32> to vector<64x1xf32>
    %82 = vector.shape_cast %56 : vector<64x1xf32> to vector<1x64x1xf32>
    tpu.vector_store %arg6[%c1_56, %c0_57, %c0_58], %82 {strides = array<i32>} : memref<2x64x1xf32, #tpu.memory_space<vmem>>, vector<1x64x1xf32>,
    %c1_i32 = arith.constant 1 : i32
    %83 = arith.cmpi eq, %arg2, %c1_i32 : i32
    %84 = arith.extui %83 : i1 to i32
    %c0_i32_59 = arith.constant 0 : i32
    %85 = arith.cmpi ne, %84, %c0_i32_59 : i32
    scf.if %85 {
      %c0_60 = arith.constant 0 : index
      %c0_61 = arith.constant 0 : index
      %c0_62 = arith.constant 0 : index
      %86 = vector.load %arg7[%c0_60, %c0_61, %c0_62] : memref<2x64x1xf32, #tpu.memory_space<vmem>>, vector<1x64x1xf32>
      %87 = vector.shape_cast %86 : vector<1x64x1xf32> to vector<64x1xf32>
      %88 = tpu.reciprocal %87 {approx = true} : vector<64x1xf32> -> vector<64x1xf32>
      %89 = arith.mulf %87, %88 : vector<64x1xf32>
      %cst_63 = arith.constant 2.000000e+00 : f32
      %90 = vector.broadcast %cst_63 : f32 to vector<64x1xf32>
      %91 = arith.subf %90, %89 : vector<64x1xf32>
      %92 = arith.mulf %88, %91 : vector<64x1xf32>
      %c0_64 = arith.constant 0 : index
      %c0_65 = arith.constant 0 : index
      %c0_66 = arith.constant 0 : index
      %93 = vector.load %arg8[%c0_64, %c0_65, %c0_66] : memref<2x64x64xf32, #tpu.memory_space<vmem>>, vector<1x64x64xf32>
      %94 = vector.shape_cast %93 : vector<1x64x64xf32> to vector<64x64xf32>
      %95 = vector.broadcast %92 : vector<64x1xf32> to vector<64x64xf32>
      %96 = arith.mulf %94, %95 : vector<64x64xf32>
      %c0_67 = arith.constant 0 : index
      %c0_68 = arith.constant 0 : index
      %c0_69 = arith.constant 0 : index
      %97 = vector.load %arg5[%c0_67, %c0_68, %c0_69] : memref<1x64x128xf32, #tpu.memory_space<vmem>>, vector<1x64x64xf32>
      %98 = vector.shape_cast %97 : vector<1x64x64xf32> to vector<64x64xf32>
      %99 = vector.shape_cast %96 : vector<64x64xf32> to vector<1x64x64xf32>
      tpu.vector_store %arg5[%c0_67, %c0_68, %c0_69], %99 {strides = array<i32>} : memref<1x64x128xf32, #tpu.memory_space<vmem>>, vector<1x64x64xf32>,
      %c1_70 = arith.constant 1 : index
      %c0_71 = arith.constant 0 : index
      %c0_72 = arith.constant 0 : index
      %100 = vector.load %arg7[%c1_70, %c0_71, %c0_72] : memref<2x64x1xf32, #tpu.memory_space<vmem>>, vector<1x64x1xf32>
      %101 = vector.shape_cast %100 : vector<1x64x1xf32> to vector<64x1xf32>
      %102 = tpu.reciprocal %101 {approx = true} : vector<64x1xf32> -> vector<64x1xf32>
      %103 = arith.mulf %101, %102 : vector<64x1xf32>
      %cst_73 = arith.constant 2.000000e+00 : f32
      %104 = vector.broadcast %cst_73 : f32 to vector<64x1xf32>
      %105 = arith.subf %104, %103 : vector<64x1xf32>
      %106 = arith.mulf %102, %105 : vector<64x1xf32>
      %c1_74 = arith.constant 1 : index
      %c0_75 = arith.constant 0 : index
      %c0_76 = arith.constant 0 : index
      %107 = vector.load %arg8[%c1_74, %c0_75, %c0_76] : memref<2x64x64xf32, #tpu.memory_space<vmem>>, vector<1x64x64xf32>
      %108 = vector.shape_cast %107 : vector<1x64x64xf32> to vector<64x64xf32>
      %109 = vector.broadcast %106 : vector<64x1xf32> to vector<64x64xf32>
      %110 = arith.mulf %108, %109 : vector<64x64xf32>
      %c0_77 = arith.constant 0 : index
      %c0_78 = arith.constant 0 : index
      %c64_79 = arith.constant 64 : index
      %111 = vector.load %arg5[%c0_77, %c0_78, %c64_79] : memref<1x64x128xf32, #tpu.memory_space<vmem>>, vector<1x64x64xf32>
      %112 = vector.shape_cast %111 : vector<1x64x64xf32> to vector<64x64xf32>
      %113 = vector.shape_cast %110 : vector<64x64xf32> to vector<1x64x64xf32>
      tpu.vector_store %arg5[%c0_77, %c0_78, %c64_79], %113 {strides = array<i32>} : memref<1x64x128xf32, #tpu.memory_space<vmem>>, vector<1x64x64xf32>,
    } else {
    }
    return
  }
  func.func @transform_0(%arg0: i32, %arg1: i32, %arg2: i32) -> (i32, i32, i32) {
    %c0_i32 = arith.constant 0 : i32
    %c0_i32_0 = arith.constant 0 : i32
    return %arg0, %arg1, %c0_i32 : i32, i32, i32
  }
  func.func @transform_1(%arg0: i32, %arg1: i32, %arg2: i32) -> (i32, i32, i32) {
    %c0_i32 = arith.constant 0 : i32
    %c0_i32_0 = arith.constant 0 : i32
    return %arg0, %arg2, %c0_i32 : i32, i32, i32
  }
  func.func @transform_2(%arg0: i32, %arg1: i32, %arg2: i32) -> (i32, i32, i32) {
    %c0_i32 = arith.constant 0 : i32
    %c0_i32_0 = arith.constant 0 : i32
    return %arg0, %arg1, %c0_i32 : i32, i32, i32
  }
}

</mosaic_0001>

<llo_original>
// kernel: tpu_custom_call.1
$region0: #{tpu_custom_call.1}
  #allocation0 [shape = 'u32[]', space=smem, size = 0x4, offset = 0x4, fixed_abs, tag = 'smem constant byte address 0x4 - core index']
  #allocation1 [shape = 'u32[144,128]{1,0:T(1,128)}', space=vmem, size = 0x12000, scoped, tag = 'internal scratch']
  #allocation2 [shape = 'f32[2,64,1]{2,1,0:T(8,128)}', space=vmem, size = 0x10000, scoped, tag = 'scratch operand']
  #allocation3 [shape = 'f32[2,64,1]{2,1,0:T(8,128)}', space=vmem, size = 0x10000, scoped, tag = 'scratch operand']
  #allocation4 [shape = 'f32[2,64,64]{2,1,0:T(8,128)}', space=vmem, size = 0x10000, scoped, tag = 'scratch operand']
  %s0 = inlined_call_operand.hbm [shape: f32[2,128,128], index: 0, kind: input, shape index: {}]
  %s1 = inlined_call_operand.hbm [shape: f32[2,128,256], index: 1, kind: input, shape index: {}]
  %s2 = inlined_call_operand.hbm [shape: f32[2,128,128], index: 2, kind: output, shape index: {}]
  %s3 = sld [smem:[#allocation0]]
  $region57: #{tpu_custom_call.1} parent=0
    _
  %s5 = ssub.s32 1, %s3
  %s6 = scalar_select 0, %s5, %s3
  $region1: #{tpu_custom_call.1} parent=0
    #allocation5 [shape = 'u8[65536]{0}', space=vmem, size = 0x10000, scoped, tag = 'input window, operand 0']
    #allocation6 [shape = 's32[2]{0}', space=sflag, size = 0x8, scoped, tag = 'scoped memory for tpu_custom_call.1']
    #allocation7 [shape = 's32[2]{0}', space=sflag, size = 0x8, scoped, tag = 'scoped memory for tpu_custom_call.1']
    #allocation8 [shape = 'u8[131072]{0}', space=vmem, size = 0x20000, scoped, tag = 'input window, operand 1']
    #allocation9 [shape = 's32[2]{0}', space=sflag, size = 0x8, scoped, tag = 'scoped memory for tpu_custom_call.1']
    #allocation10 [shape = 'u8[65536]{0}', space=vmem, size = 0x10000, scoped, tag = 'output window, operand 0']
    %7 = vsyncpa [#allocation6], 0
    %s8 = scalar_lea.sflag [#allocation6], 1
    %9 = vsyncpa %s8, 0
    %10 = vsyncpa [#allocation9], 0
    %s11 = scalar_lea.sflag [#allocation9], 1
    %12 = vsyncpa %s11, 0
    %13 = vsyncpa [#allocation7], 0
    %s14 = scalar_lea.sflag [#allocation7], 1
    %15 = vsyncpa %s14, 0
    loop: start=0, step=1, limit=10
    $region2: #{tpu_custom_call.1} parent=1 // loop_pre_header
      _
    $region3: #{tpu_custom_call.1} parent=1 // loop_header
      %s17 = sphi 0, %s21
      %p18 = scmp.ge.s32.totalorder %s17, 10
      %s24 = sphi 0, %s43
      %s25 = sphi 0, %s39
      %s26 = sphi 0, %s35
      %s27 = sphi 0, %s24
      %s28 = sphi 0, %s25
      %s29 = sphi 0, %s26
      %s30 = sphi 0, %s27
      %s31 = sphi 0, %s28
      %s32 = sphi 0, %s29
      %s48 = sphi 0, %s50
      %s51 = sphi 0, %s48
      %s52 = sphi 0, %s51
      %s68 = sphi 0, %s52
      %s76 = sphi 0, %s78
      %s79 = sphi 0, %s76
      %s80 = sphi 0, %s79
      %s96 = sphi 0, %s80
      %s104 = sphi 0, %s106
      %s107 = sphi 0, %s104
      %s108 = sphi 0, %s107
      %s124 = sphi 0, %s108
    $region4: #{tpu_custom_call.1} parent=1 // loop_header_branch
      %20 = sbr.rel (%p18) target = $region8
    $region5: #{tpu_custom_call.1} parent=1 // loop_body
      %s22 = ssub.s32 %s17, 1
      %s23 = ssub.s32 %s17, 2
      %s33 = sadd.s32 1, %s26
      %p34 = scmp.ge.s32.totalorder %s33, 2
      %s35 = scalar_select %p34, 0, %s33
      %s36 = sadd.s32 1, %s25
      %s37 = scalar_select %p34, %s36, %s25
      %p38 = scmp.ge.s32.totalorder %s37, 2
      %s39 = scalar_select %p38, 0, %s37
      %s40 = sadd.s32 1, %s24
      %s41 = scalar_select %p38, %s40, %s24
      %p42 = scmp.ge.s32.totalorder %s41, 2
      %s43 = scalar_select %p42, 0, %s41
      %s44 = ssub.s32 %s24, %s43
      %s45 = ssub.s32 %s25, %s39
      %s46 = sor.u32 %s44, %s45
      %p47 = scmp.eq.s32.totalorder %s46, 0
      %s49 = sadd.s32 %s48, 1
      %s50 = scalar_select %p47, %s48, %s49
      %p53 = pneg %p47
      %p54 = scmp.eq.s32.totalorder %s17, 7
      %p55 = por %p53, %p54
      %p56 = scmp.ne.s32.totalorder %s48, %s51
      %p57 = scmp.eq.s32.totalorder %s17, 0
      %p58 = por %p56, %p57
      %p59 = scmp.ne.s32.totalorder %s48, %s51
      %p60 = scmp.eq.s32.totalorder %s22, 7
      %p61 = por %p59, %p60
      %p62 = scmp.ne.s32.totalorder %s51, %s52
      %p63 = scmp.eq.s32.totalorder %s22, 0
      %p64 = por %p62, %p63
      %p65 = scmp.ne.s32.totalorder %s51, %s52
      %p66 = scmp.eq.s32.totalorder %s23, 7
      %p67 = por %p65, %p66
      %p69 = scmp.ne.s32.totalorder %s52, %s68
      %p70 = scmp.eq.s32.totalorder %s23, 0
      %p71 = por %p69, %p70
      %s72 = ssub.s32 %s24, %s43
      %s73 = ssub.s32 %s26, %s35
      %s74 = sor.u32 %s72, %s73
      %p75 = scmp.eq.s32.totalorder %s74, 0
      %s77 = sadd.s32 %s76, 1
      %s78 = scalar_select %p75, %s76, %s77
      %p81 = pneg %p75
      %p82 = scmp.eq.s32.totalorder %s17, 7
      %p83 = por %p81, %p82
      %p84 = scmp.ne.s32.totalorder %s76, %s79
      %p85 = scmp.eq.s32.totalorder %s17, 0
      %p86 = por %p84, %p85
      %p87 = scmp.ne.s32.totalorder %s76, %s79
      %p88 = scmp.eq.s32.totalorder %s22, 7
      %p89 = por %p87, %p88
      %p90 = scmp.ne.s32.totalorder %s79, %s80
      %p91 = scmp.eq.s32.totalorder %s22, 0
      %p92 = por %p90, %p91
      %p93 = scmp.ne.s32.totalorder %s79, %s80
      %p94 = scmp.eq.s32.totalorder %s23, 7
      %p95 = por %p93, %p94
      %p97 = scmp.ne.s32.totalorder %s80, %s96
      %p98 = scmp.eq.s32.totalorder %s23, 0
      %p99 = por %p97, %p98
      %s100 = ssub.s32 %s24, %s43
      %s101 = ssub.s32 %s25, %s39
      %s102 = sor.u32 %s100, %s101
      %p103 = scmp.eq.s32.totalorder %s102, 0
      %s105 = sadd.s32 %s104, 1
      %s106 = scalar_select %p103, %s104, %s105
      %p109 = pneg %p103
      %p110 = scmp.eq.s32.totalorder %s17, 7
      %p111 = por %p109, %p110
      %p112 = scmp.ne.s32.totalorder %s104, %s107
      %p113 = scmp.eq.s32.totalorder %s17, 0
      %p114 = por %p112, %p113
      %p115 = scmp.ne.s32.totalorder %s104, %s107
      %p116 = scmp.eq.s32.totalorder %s22, 7
      %p117 = por %p115, %p116
      %p118 = scmp.ne.s32.totalorder %s107, %s108
      %p119 = scmp.eq.s32.totalorder %s22, 0
      %p120 = por %p118, %p119
      %p121 = scmp.ne.s32.totalorder %s107, %s108
      %p122 = scmp.eq.s32.totalorder %s23, 7
      %p123 = por %p121, %p122
      %p125 = scmp.ne.s32.totalorder %s108, %s124
      %p126 = scmp.eq.s32.totalorder %s23, 0
      %p127 = por %p125, %p126
      %p128 = scmp.le.s32.totalorder 1, %s17
      %p129 = scmp.lt.s32.totalorder %s17, 9
      %p130 = pnand %p128, %p129
      %p131 = pneg %p130
      // Predicated region
      $region9: #{tpu_custom_call.1} parent=5 // pred_check
        _
      $region10: #{tpu_custom_call.1} parent=5 // pred_check_branch
        %133 = sbr.rel (%p130) target = $region12
      $region11: #{tpu_custom_call.1} parent=5 // pred_region
        %s134 = ssub.s32 %s17, 1
      $region12: #{tpu_custom_call.1} parent=5 // pred_fallthru
        _
      %p135 = scmp.lt.s32.totalorder %s17, 8
      // Predicated region
      $region13: #{tpu_custom_call.1} parent=5 // pred_check
        %p136 = pneg %p135
      $region14: #{tpu_custom_call.1} parent=5 // pred_check_branch
        %138 = sbr.rel (%p136) target = $region16
      $region15: #{tpu_custom_call.1} parent=5 // pred_region
        // Predicated region
        $region17: #{tpu_custom_call.1} parent=15 // pred_check
          %p139 = pneg %p58
        $region18: #{tpu_custom_call.1} parent=15 // pred_check_branch
          %141 = sbr.rel (%p139) target = $region20
        $region19: #{tpu_custom_call.1} parent=15 // pred_region
          %s142 = sand.u32 %s48, 1
          %s143 = scalar_lea.sflag [#allocation6], %s142
          %s144 = sand.u32 %s48, 1
          %s145 = smul.addr %s144, 64
          %s146 = scalar_lea.vmem [#allocation5], %s145
          %s147 = smul.u32 8, %s25
          %s149 = ssub.s32 1024, 1024
          %150 = vsyncadd %s143, %s149
          %s151 = smul.addr %s24, 16
          %s152 = sadd.s32 %s147, %s151
          %s153 = smul.addr %s152, 128
          %s154 = scalar_lea.hbm %s0, %s153
          %s155 = sshll.u32 %s146, 4
          %s156 = int_to_ptr.vmem [resolvable:$true] %s155
          %161 = dma.hbm_to_vmem [thread:$0]  %s154, 1024, %s156, %s143, 128, 128, 8
        $region20: #{tpu_custom_call.1} parent=15 // pred_fallthru
          _
        // Predicated region
        $region21: #{tpu_custom_call.1} parent=15 // pred_check
          %p162 = pneg %p86
        $region22: #{tpu_custom_call.1} parent=15 // pred_check_branch
          %164 = sbr.rel (%p162) target = $region24
        $region23: #{tpu_custom_call.1} parent=15 // pred_region
          %s165 = sand.u32 %s76, 1
          %s166 = scalar_lea.sflag [#allocation9], %s165
          %s167 = sand.u32 %s76, 1
          %s168 = smul.addr %s167, 128
          %s169 = scalar_lea.vmem [#allocation8], %s168
          %s170 = smul.u32 8, %s26
          %s172 = ssub.s32 2048, 2048
          %173 = vsyncadd %s166, %s172
          %s174 = smul.addr %s170, 2
          %s175 = smul.addr %s24, 32
          %s176 = sadd.s32 %s174, %s175
          %s177 = smul.addr %s176, 128
          %s178 = scalar_lea.hbm %s1, %s177
          %s179 = sshll.u32 %s169, 4
          %s180 = int_to_ptr.vmem [resolvable:$true] %s179
          %185 = dma.hbm_to_vmem [thread:$0]  %s178, 2048, %s180, %s166, 256, 256, 16
        $region24: #{tpu_custom_call.1} parent=15 // pred_fallthru
          _
      $region16: #{tpu_custom_call.1} parent=5 // pred_fallthru
        _
      %p186 = scmp.le.s32.totalorder 1, %s17
      %p187 = scmp.lt.s32.totalorder %s17, 9
      %p188 = pnand %p186, %p187
      %p189 = pneg %p188
      // Predicated region
      $region25: #{tpu_custom_call.1} parent=5 // pred_check
        _
      $region26: #{tpu_custom_call.1} parent=5 // pred_check_branch
        %191 = sbr.rel (%p188) target = $region28
      $region27: #{tpu_custom_call.1} parent=5 // pred_region
        %s192 = ssub.s32 %s17, 1
        %s193 = sand.u32 %s51, 1
        %s194 = scalar_lea.sflag [#allocation6], %s193
        %s195 = sand.u32 %s51, 1
        %s196 = smul.addr %s195, 64
        %s197 = scalar_lea.vmem [#allocation5], %s196
        // Predicated region
        $region29: #{tpu_custom_call.1} parent=27 // pred_check
          %p198 = pneg %p64
        $region30: #{tpu_custom_call.1} parent=27 // pred_check_branch
          %200 = sbr.rel (%p198) target = $region32
        $region31: #{tpu_custom_call.1} parent=27 // pred_region
          %201 = dma.done %s194, 1024
        $region32: #{tpu_custom_call.1} parent=27 // pred_fallthru
          _
        %s202 = sand.u32 %s79, 1
        %s203 = scalar_lea.sflag [#allocation9], %s202
        %s204 = sand.u32 %s79, 1
        %s205 = smul.addr %s204, 128
        %s206 = scalar_lea.vmem [#allocation8], %s205
        // Predicated region
        $region33: #{tpu_custom_call.1} parent=27 // pred_check
          %p207 = pneg %p92
        $region34: #{tpu_custom_call.1} parent=27 // pred_check_branch
          %209 = sbr.rel (%p207) target = $region36
        $region35: #{tpu_custom_call.1} parent=27 // pred_region
          %210 = dma.done %s203, 2048
        $region36: #{tpu_custom_call.1} parent=27 // pred_fallthru
          _
        %s211 = sand.u32 %s51, 1
        %s212 = scalar_lea.sflag [#allocation6], %s211
        %s213 = sand.u32 %s51, 1
        %s214 = smul.addr %s213, 64
        %s215 = scalar_lea.vmem [#allocation5], %s214
        %p216 = pneg %p64
        %p217 = pneg %p61
        %s218 = sand.u32 %s79, 1
        %s219 = scalar_lea.sflag [#allocation9], %s218
        %s220 = sand.u32 %s79, 1
        %s221 = smul.addr %s220, 128
        %s222 = scalar_lea.vmem [#allocation8], %s221
        %p223 = pneg %p92
        %p224 = pneg %p89
        %p225 = pneg %p120
        %p226 = pneg %p117
        %s227 = sand.u32 %s107, 1
        %s228 = scalar_lea.sflag [#allocation7], %s227
        %s229 = sand.u32 %s107, 1
        %s230 = smul.addr %s229, 64
        %s231 = scalar_lea.vmem [#allocation10], %s230
        %s232 = smul.u32 8, %s28
        %s233 = smul.u32 8, %s29
        %s234 = smul.u32 8, %s28
        %p235 = scmp.eq.s32.totalorder %s29, 0
        // Predicated region
        $region37: #{tpu_custom_call.1} parent=27 // pred_check
          %p236 = pneg %p235
        $region38: #{tpu_custom_call.1} parent=27 // pred_check_branch
          %238 = sbr.rel (%p236) target = $region40
        $region39: #{tpu_custom_call.1} parent=27 // pred_region
          %vm239 = vcmask 7168
          %240 = vst.msk [vmem:[#allocation2] sm:$0xff] %vm239, -inf
          %241 = vst.msk [vmem:[#allocation2 + $0x8] sm:$0xff] %vm239, -inf
          %242 = vst.msk [vmem:[#allocation2 + $0x10] sm:$0xff] %vm239, -inf
          %243 = vst.msk [vmem:[#allocation2 + $0x18] sm:$0xff] %vm239, -inf
          %244 = vst.msk [vmem:[#allocation2 + $0x20] sm:$0xff] %vm239, -inf
          %245 = vst.msk [vmem:[#allocation2 + $0x28] sm:$0xff] %vm239, -inf
          %246 = vst.msk [vmem:[#allocation2 + $0x30] sm:$0xff] %vm239, -inf
          %247 = vst.msk [vmem:[#allocation2 + $0x38] sm:$0xff] %vm239, -inf
          %248 = vst.msk [vmem:[#allocation2 + $0x40] sm:$0xff] %vm239, -inf
          %249 = vst.msk [vmem:[#allocation2 + $0x48] sm:$0xff] %vm239, -inf
          %250 = vst.msk [vmem:[#allocation2 + $0x50] sm:$0xff] %vm239, -inf
          %251 = vst.msk [vmem:[#allocation2 + $0x58] sm:$0xff] %vm239, -inf
          %252 = vst.msk [vmem:[#allocation2 + $0x60] sm:$0xff] %vm239, -inf
          %253 = vst.msk [vmem:[#allocation2 + $0x68] sm:$0xff] %vm239, -inf
          %254 = vst.msk [vmem:[#allocation2 + $0x70] sm:$0xff] %vm239, -inf
          %255 = vst.msk [vmem:[#allocation2 + $0x78] sm:$0xff] %vm239, -inf
          %256 = vst.msk [vmem:[#allocation3] sm:$0xff] %vm239, 0.0
          %257 = vst.msk [vmem:[#allocation3 + $0x8] sm:$0xff] %vm239, 0.0
          %258 = vst.msk [vmem:[#allocation3 + $0x10] sm:$0xff] %vm239, 0.0
          %259 = vst.msk [vmem:[#allocation3 + $0x18] sm:$0xff] %vm239, 0.0
          %260 = vst.msk [vmem:[#allocation3 + $0x20] sm:$0xff] %vm239, 0.0
          %261 = vst.msk [vmem:[#allocation3 + $0x28] sm:$0xff] %vm239, 0.0
          %262 = vst.msk [vmem:[#allocation3 + $0x30] sm:$0xff] %vm239, 0.0
          %263 = vst.msk [vmem:[#allocation3 + $0x38] sm:$0xff] %vm239, 0.0
          %264 = vst.msk [vmem:[#allocation3 + $0x40] sm:$0xff] %vm239, 0.0
          %265 = vst.msk [vmem:[#allocation3 + $0x48] sm:$0xff] %vm239, 0.0
          %266 = vst.msk [vmem:[#allocation3 + $0x50] sm:$0xff] %vm239, 0.0
          %267 = vst.msk [vmem:[#allocation3 + $0x58] sm:$0xff] %vm239, 0.0
          %268 = vst.msk [vmem:[#allocation3 + $0x60] sm:$0xff] %vm239, 0.0
          %269 = vst.msk [vmem:[#allocation3 + $0x68] sm:$0xff] %vm239, 0.0
          %270 = vst.msk [vmem:[#allocation3 + $0x70] sm:$0xff] %vm239, 0.0
          %271 = vst.msk [vmem:[#allocation3 + $0x78] sm:$0xff] %vm239, 0.0
          %vm272 = vcmask 523264
          %273 = vst.msk [vmem:[#allocation4] sm:$0xff] %vm272, 0.0
          %274 = vst.msk [vmem:[#allocation4 + $0x8] sm:$0xff] %vm272, 0.0
          %275 = vst.msk [vmem:[#allocation4 + $0x10] sm:$0xff] %vm272, 0.0
          %276 = vst.msk [vmem:[#allocation4 + $0x18] sm:$0xff] %vm272, 0.0
          %277 = vst.msk [vmem:[#allocation4 + $0x20] sm:$0xff] %vm272, 0.0
          %278 = vst.msk [vmem:[#allocation4 + $0x28] sm:$0xff] %vm272, 0.0
          %279 = vst.msk [vmem:[#allocation4 + $0x30] sm:$0xff] %vm272, 0.0
          %280 = vst.msk [vmem:[#allocation4 + $0x38] sm:$0xff] %vm272, 0.0
          %281 = vst.msk [vmem:[#allocation4 + $0x40] sm:$0xff] %vm272, 0.0
          %282 = vst.msk [vmem:[#allocation4 + $0x48] sm:$0xff] %vm272, 0.0
          %283 = vst.msk [vmem:[#allocation4 + $0x50] sm:$0xff] %vm272, 0.0
          %284 = vst.msk [vmem:[#allocation4 + $0x58] sm:$0xff] %vm272, 0.0
          %285 = vst.msk [vmem:[#allocation4 + $0x60] sm:$0xff] %vm272, 0.0
          %286 = vst.msk [vmem:[#allocation4 + $0x68] sm:$0xff] %vm272, 0.0
          %287 = vst.msk [vmem:[#allocation4 + $0x70] sm:$0xff] %vm272, 0.0
          %288 = vst.msk [vmem:[#allocation4 + $0x78] sm:$0xff] %vm272, 0.0
        $region40: #{tpu_custom_call.1} parent=27 // pred_fallthru
          _
        %v289 = vld [vmem:[%s206] sm:$0xff]
        %v290 = vld [vmem:[%s206 + $0x10] sm:$0xff]
        %v291 = vld [vmem:[%s206 + $0x20] sm:$0xff]
        %v292 = vld [vmem:[%s206 + $0x30] sm:$0xff]
        %v293 = vld [vmem:[%s206 + $0x40] sm:$0xff]
        %v294 = vld [vmem:[%s206 + $0x50] sm:$0xff]
        %v295 = vld [vmem:[%s206 + $0x60] sm:$0xff]
        %v296 = vld [vmem:[%s206 + $0x70] sm:$0xff]
        %v297 = vld [vmem:[%s206 + $0x8] sm:$0xff]
        %v298 = vld [vmem:[%s206 + $0x18] sm:$0xff]
        %v299 = vld [vmem:[%s206 + $0x28] sm:$0xff]
        %v300 = vld [vmem:[%s206 + $0x38] sm:$0xff]
        %v301 = vld [vmem:[%s206 + $0x48] sm:$0xff]
        %v302 = vld [vmem:[%s206 + $0x58] sm:$0xff]
        %v303 = vld [vmem:[%s206 + $0x68] sm:$0xff]
        %v304 = vld [vmem:[%s206 + $0x78] sm:$0xff]
        %v305 = vld [vmem:[%s197] sm:$0xff]
        %v306 = vld [vmem:[%s197 + $0x8] sm:$0xff]
        %v307 = vld [vmem:[%s197 + $0x10] sm:$0xff]
        %v308 = vld [vmem:[%s197 + $0x18] sm:$0xff]
        %v309 = vld [vmem:[%s197 + $0x20] sm:$0xff]
        %v310 = vld [vmem:[%s197 + $0x28] sm:$0xff]
        %v311 = vld [vmem:[%s197 + $0x30] sm:$0xff]
        %v312 = vld [vmem:[%s197 + $0x38] sm:$0xff]
        %v313 = vmul.f32 %v305, 0.125
        %v314 = vmul.f32 %v306, 0.125
        %v315 = vmul.f32 %v307, 0.125
        %v316 = vmul.f32 %v308, 0.125
        %v317 = vmul.f32 %v309, 0.125
        %v318 = vmul.f32 %v310, 0.125
        %v319 = vmul.f32 %v311, 0.125
        %v320 = vmul.f32 %v312, 0.125
        %vm321 = vcmask 523264
        %v323 = vsel %vm321, %v313, 0
        %v326 = vsel %vm321, %v314, 0
        %v329 = vsel %vm321, %v315, 0
        %v332 = vsel %vm321, %v316, 0
        %v335 = vsel %vm321, %v317, 0
        %v338 = vsel %vm321, %v318, 0
        %v341 = vsel %vm321, %v319, 0
        %v344 = vsel %vm321, %v320, 0
        %v347 = vsel %vm321, %v289, 0
        %v350 = vsel %vm321, %v290, 0
        %v353 = vsel %vm321, %v291, 0
        %v356 = vsel %vm321, %v292, 0
        %v359 = vsel %vm321, %v293, 0
        %v362 = vsel %vm321, %v294, 0
        %v365 = vsel %vm321, %v295, 0
        %v368 = vsel %vm321, %v296, 0
        %370 = vmatprep.subr.mxu0 0.0
        %371 = vmatpush1.xpose.msra.mxu0 0.0
        %372 = vmatprep.subr.mxu0 0.0
        %373 = vmatpush1.xpose.msra.mxu0 0.0
        %374 = vmatprep.subr.mxu0 0.0
        %375 = vmatpush1.xpose.msra.mxu0 0.0
        %376 = vmatprep.subr.mxu0 0.0
        %377 = vmatpush1.xpose.msra.mxu0 0.0
        %378 = vmatprep.subr.mxu0 0.0
        %379 = vmatpush1.xpose.msra.mxu0 0.0
        %380 = vmatprep.subr.mxu0 0.0
        %381 = vmatpush1.xpose.msra.mxu0 0.0
        %382 = vmatprep.subr.mxu0 0.0
        %383 = vmatpush1.xpose.msra.mxu0 0.0
        %384 = vmatprep.subr.mxu0 0.0
        %385 = vmatpush1.xpose.msra.mxu0 0.0
        %386 = vmatprep.subr.mxu0 0.0
        %387 = vmatpush1.xpose.msra.mxu0 %v368
        %388 = vmatprep.subr.mxu0 0.0
        %389 = vmatpush1.xpose.msra.mxu0 %v365
        %390 = vmatprep.subr.mxu0 0.0
        %391 = vmatpush1.xpose.msra.mxu0 %v362
        %392 = vmatprep.subr.mxu0 0.0
        %393 = vmatpush1.xpose.msra.mxu0 %v359
        %394 = vmatprep.subr.mxu0 0.0
        %395 = vmatpush1.xpose.msra.mxu0 %v356
        %396 = vmatprep.subr.mxu0 0.0
        %397 = vmatpush1.xpose.msra.mxu0 %v353
        %398 = vmatprep.subr.mxu0 0.0
        %399 = vmatpush1.xpose.msra.mxu0 %v350
        %400 = vmatprep.subr.mxu0 0.0
        %401 = vmatpush1.xpose.msra.mxu0 %v347
        %402 = vmatprep.subr.mxu0 0.0
        %403 = vmatpush2.xpose.msra.mxu0 0.0
        %404 = vmatprep.subr.mxu0 0.0
        %405 = vmatpush2.xpose.msra.mxu0 0.0
        %406 = vmatprep.subr.mxu0 0.0
        %407 = vmatpush2.xpose.msra.mxu0 0.0
        %408 = vmatprep.subr.mxu0 0.0
        %409 = vmatpush2.xpose.msra.mxu0 0.0
        %410 = vmatprep.subr.mxu0 0.0
        %411 = vmatpush2.xpose.msra.mxu0 0.0
        %412 = vmatprep.subr.mxu0 0.0
        %413 = vmatpush2.xpose.msra.mxu0 0.0
        %414 = vmatprep.subr.mxu0 0.0
        %415 = vmatpush2.xpose.msra.mxu0 0.0
        %416 = vmatprep.subr.mxu0 0.0
        %417 = vmatpush2.xpose.msra.mxu0 0.0
        %418 = vmatprep.subr.mxu0 0.0
        %419 = vmatpush2.xpose.msra.mxu0 0.0
        %420 = vmatprep.subr.mxu0 0.0
        %421 = vmatpush2.xpose.msra.mxu0 0.0
        %422 = vmatprep.subr.mxu0 0.0
        %423 = vmatpush2.xpose.msra.mxu0 0.0
        %424 = vmatprep.subr.mxu0 0.0
        %425 = vmatpush2.xpose.msra.mxu0 0.0
        %426 = vmatprep.subr.mxu0 0.0
        %427 = vmatpush2.xpose.msra.mxu0 0.0
        %428 = vmatprep.subr.mxu0 0.0
        %429 = vmatpush2.xpose.msra.mxu0 0.0
        %430 = vmatprep.subr.mxu0 0.0
        %431 = vmatpush2.xpose.msra.mxu0 0.0
        %432 = vmatprep.subr.mxu0 0.0
        %433 = vmatpush2.xpose.msra.mxu0 0.0
        %434 = vmatprep.mubr.f32.mxu0 0.0
        %435 = vmatmul.mubr.f32.gmra.mxu0 %v323
        %v436 = vpop.f32.mrf.mxu0
        %v437 = vadd.f32 0.0, %v436
        %v438 = vpop.f32.mrf.mxu0
        %439 = vmatprep.mubr.f32.mxu0 0.0
        %440 = vmatmul.mubr.f32.gmra.mxu0 %v326
        %v441 = vpop.f32.mrf.mxu0
        %v442 = vadd.f32 0.0, %v441
        %v443 = vpop.f32.mrf.mxu0
        %444 = vmatprep.mubr.f32.mxu0 0.0
        %445 = vmatmul.mubr.f32.gmra.mxu0 %v329
        %v446 = vpop.f32.mrf.mxu0
        %v447 = vadd.f32 0.0, %v446
        %v448 = vpop.f32.mrf.mxu0
        %449 = vmatprep.mubr.f32.mxu0 0.0
        %450 = vmatmul.mubr.f32.gmra.mxu0 %v332
        %v451 = vpop.f32.mrf.mxu0
        %v452 = vadd.f32 0.0, %v451
        %v453 = vpop.f32.mrf.mxu0
        %454 = vmatprep.mubr.f32.mxu0 0.0
        %455 = vmatmul.mubr.f32.gmra.mxu0 %v335
        %v456 = vpop.f32.mrf.mxu0
        %v457 = vadd.f32 0.0, %v456
        %v458 = vpop.f32.mrf.mxu0
        %459 = vmatprep.mubr.f32.mxu0 0.0
        %460 = vmatmul.mubr.f32.gmra.mxu0 %v338
        %v461 = vpop.f32.mrf.mxu0
        %v462 = vadd.f32 0.0, %v461
        %v463 = vpop.f32.mrf.mxu0
        %464 = vmatprep.mubr.f32.mxu0 0.0
        %465 = vmatmul.mubr.f32.gmra.mxu0 %v341
        %v466 = vpop.f32.mrf.mxu0
        %v467 = vadd.f32 0.0, %v466
        %v468 = vpop.f32.mrf.mxu0
        %469 = vmatprep.mubr.f32.mxu0 0.0
        %470 = vmatmul.mubr.f32.gmra.mxu0 %v344
        %v471 = vpop.f32.mrf.mxu0
        %v472 = vadd.f32 0.0, %v471
        %v473 = vpop.f32.mrf.mxu0
        %474 = vdwg.mxu0
        %v475 = vld [vmem:[#allocation2] sm:$0xff]
        %v476 = vld [vmem:[#allocation2 + $0x8] sm:$0xff]
        %v477 = vld [vmem:[#allocation2 + $0x10] sm:$0xff]
        %v478 = vld [vmem:[#allocation2 + $0x18] sm:$0xff]
        %v479 = vld [vmem:[#allocation2 + $0x20] sm:$0xff]
        %v480 = vld [vmem:[#allocation2 + $0x28] sm:$0xff]
        %v481 = vld [vmem:[#allocation2 + $0x30] sm:$0xff]
        %v482 = vld [vmem:[#allocation2 + $0x38] sm:$0xff]
        %v483 = vsel %vm321, %v437, -inf
        %484 = vmax.xlane.f32.xlu0 %v483
        %v485 = vpop.xlane.xlu0 %484
        %v486 = vsel %vm321, %v442, -inf
        %487 = vmax.xlane.f32.xlu0 %v486
        %v488 = vpop.xlane.xlu0 %487
        %v489 = vsel %vm321, %v447, -inf
        %490 = vmax.xlane.f32.xlu0 %v489
        %v491 = vpop.xlane.xlu0 %490
        %v492 = vsel %vm321, %v452, -inf
        %493 = vmax.xlane.f32.xlu0 %v492
        %v494 = vpop.xlane.xlu0 %493
        %v495 = vsel %vm321, %v457, -inf
        %496 = vmax.xlane.f32.xlu0 %v495
        %v497 = vpop.xlane.xlu0 %496
        %v498 = vsel %vm321, %v462, -inf
        %499 = vmax.xlane.f32.xlu0 %v498
        %v500 = vpop.xlane.xlu0 %499
        %v501 = vsel %vm321, %v467, -inf
        %502 = vmax.xlane.f32.xlu0 %v501
        %v503 = vpop.xlane.xlu0 %502
        %v504 = vsel %vm321, %v472, -inf
        %505 = vmax.xlane.f32.xlu0 %v504
        %v506 = vpop.xlane.xlu0 %505
        %v507 = vmax.f32 %v475, %v485
        %v508 = vmax.f32 %v476, %v488
        %v509 = vmax.f32 %v477, %v491
        %v510 = vmax.f32 %v478, %v494
        %v511 = vmax.f32 %v479, %v497
        %v512 = vmax.f32 %v480, %v500
        %v513 = vmax.f32 %v481, %v503
        %v514 = vmax.f32 %v482, %v506
        %v515 = vsub.f32 %v475, %v507
        %v516 = vsub.f32 %v476, %v508
        %v517 = vsub.f32 %v477, %v509
        %v518 = vsub.f32 %v478, %v510
        %v519 = vsub.f32 %v479, %v511
        %v520 = vsub.f32 %v480, %v512
        %v521 = vsub.f32 %v481, %v513
        %v522 = vsub.f32 %v482, %v514
        %v523 = vmul.f32 %v515, 1.442695
        %v524 = vpow.pop %v523
        %v525 = vmul.f32 %v516, 1.442695
        %v526 = vpow.pop %v525
        %v527 = vmul.f32 %v517, 1.442695
        %v528 = vpow.pop %v527
        %v529 = vmul.f32 %v518, 1.442695
        %v530 = vpow.pop %v529
        %v531 = vmul.f32 %v519, 1.442695
        %v532 = vpow.pop %v531
        %v533 = vmul.f32 %v520, 1.442695
        %v534 = vpow.pop %v533
        %v535 = vmul.f32 %v521, 1.442695
        %v536 = vpow.pop %v535
        %v537 = vmul.f32 %v522, 1.442695
        %v538 = vpow.pop %v537
        %540 = vset.pattern.permute.xlu0 0
        %541 = vperm.xlu0 %540, %v507
        %v542 = vpop.permute.xlu0 %541
        %545 = vset.pattern.permute.xlu0 0
        %546 = vperm.xlu0 %545, %v508
        %v547 = vpop.permute.xlu0 %546
        %550 = vset.pattern.permute.xlu0 0
        %551 = vperm.xlu0 %550, %v509
        %v552 = vpop.permute.xlu0 %551
        %555 = vset.pattern.permute.xlu0 0
        %556 = vperm.xlu0 %555, %v510
        %v557 = vpop.permute.xlu0 %556
        %560 = vset.pattern.permute.xlu0 0
        %561 = vperm.xlu0 %560, %v511
        %v562 = vpop.permute.xlu0 %561
        %565 = vset.pattern.permute.xlu0 0
        %566 = vperm.xlu0 %565, %v512
        %v567 = vpop.permute.xlu0 %566
        %570 = vset.pattern.permute.xlu0 0
        %571 = vperm.xlu0 %570, %v513
        %v572 = vpop.permute.xlu0 %571
        %575 = vset.pattern.permute.xlu0 0
        %576 = vperm.xlu0 %575, %v514
        %v577 = vpop.permute.xlu0 %576
        %v579 = vsub.f32 %v437, %v542
        %v580 = vsub.f32 %v442, %v547
        %v581 = vsub.f32 %v447, %v552
        %v582 = vsub.f32 %v452, %v557
        %v583 = vsub.f32 %v457, %v562
        %v584 = vsub.f32 %v462, %v567
        %v585 = vsub.f32 %v467, %v572
        %v586 = vsub.f32 %v472, %v577
        %v587 = vmul.f32 %v579, 1.442695
        %v588 = vpow.pop %v587
        %v589 = vmul.f32 %v580, 1.442695
        %v590 = vpow.pop %v589
        %v591 = vmul.f32 %v581, 1.442695
        %v592 = vpow.pop %v591
        %v593 = vmul.f32 %v582, 1.442695
        %v594 = vpow.pop %v593
        %v595 = vmul.f32 %v583, 1.442695
        %v596 = vpow.pop %v595
        %v597 = vmul.f32 %v584, 1.442695
        %v598 = vpow.pop %v597
        %v599 = vmul.f32 %v585, 1.442695
        %v600 = vpow.pop %v599
        %v601 = vmul.f32 %v586, 1.442695
        %v602 = vpow.pop %v601
        %v603 = vld [vmem:[#allocation3] sm:$0xff]
        %v604 = vld [vmem:[#allocation3 + $0x8] sm:$0xff]
        %v605 = vld [vmem:[#allocation3 + $0x10] sm:$0xff]
        %v606 = vld [vmem:[#allocation3 + $0x18] sm:$0xff]
        %v607 = vld [vmem:[#allocation3 + $0x20] sm:$0xff]
        %v608 = vld [vmem:[#allocation3 + $0x28] sm:$0xff]
        %v609 = vld [vmem:[#allocation3 + $0x30] sm:$0xff]
        %v610 = vld [vmem:[#allocation3 + $0x38] sm:$0xff]
        %v611 = vmul.f32 %v524, %v603
        %v612 = vmul.f32 %v526, %v604
        %v613 = vmul.f32 %v528, %v605
        %v614 = vmul.f32 %v530, %v606
        %v615 = vmul.f32 %v532, %v607
        %v616 = vmul.f32 %v534, %v608
        %v617 = vmul.f32 %v536, %v609
        %v618 = vmul.f32 %v538, %v610
        %v619 = vsel %vm321, %v588, 0.0
        %620 = vadd.xlane.f32.xlu0 %v619
        %v621 = vpop.xlane.xlu0 %620
        %v622 = vsel %vm321, %v590, 0.0
        %623 = vadd.xlane.f32.xlu0 %v622
        %v624 = vpop.xlane.xlu0 %623
        %v625 = vsel %vm321, %v592, 0.0
        %626 = vadd.xlane.f32.xlu0 %v625
        %v627 = vpop.xlane.xlu0 %626
        %v628 = vsel %vm321, %v594, 0.0
        %629 = vadd.xlane.f32.xlu0 %v628
        %v630 = vpop.xlane.xlu0 %629
        %v631 = vsel %vm321, %v596, 0.0
        %632 = vadd.xlane.f32.xlu0 %v631
        %v633 = vpop.xlane.xlu0 %632
        %v634 = vsel %vm321, %v598, 0.0
        %635 = vadd.xlane.f32.xlu0 %v634
        %v636 = vpop.xlane.xlu0 %635
        %v637 = vsel %vm321, %v600, 0.0
        %638 = vadd.xlane.f32.xlu0 %v637
        %v639 = vpop.xlane.xlu0 %638
        %v640 = vsel %vm321, %v602, 0.0
        %641 = vadd.xlane.f32.xlu0 %v640
        %v642 = vpop.xlane.xlu0 %641
        %v643 = vadd.f32 %v611, %v621
        %v644 = vadd.f32 %v612, %v624
        %v645 = vadd.f32 %v613, %v627
        %v646 = vadd.f32 %v614, %v630
        %v647 = vadd.f32 %v615, %v633
        %v648 = vadd.f32 %v616, %v636
        %v649 = vadd.f32 %v617, %v639
        %v650 = vadd.f32 %v618, %v642
        %vm651 = vcmask 7168
        %652 = vst.msk [vmem:[#allocation3] sm:$0xff] %vm651, %v643
        %653 = vst.msk [vmem:[#allocation3 + $0x8] sm:$0xff] %vm651, %v644
        %654 = vst.msk [vmem:[#allocation3 + $0x10] sm:$0xff] %vm651, %v645
        %655 = vst.msk [vmem:[#allocation3 + $0x18] sm:$0xff] %vm651, %v646
        %656 = vst.msk [vmem:[#allocation3 + $0x20] sm:$0xff] %vm651, %v647
        %657 = vst.msk [vmem:[#allocation3 + $0x28] sm:$0xff] %vm651, %v648
        %658 = vst.msk [vmem:[#allocation3 + $0x30] sm:$0xff] %vm651, %v649
        %659 = vst.msk [vmem:[#allocation3 + $0x38] sm:$0xff] %vm651, %v650
        %v660 = vld [vmem:[#allocation4] sm:$0xff]
        %v661 = vld [vmem:[#allocation4 + $0x8] sm:$0xff]
        %v662 = vld [vmem:[#allocation4 + $0x10] sm:$0xff]
        %v663 = vld [vmem:[#allocation4 + $0x18] sm:$0xff]
        %v664 = vld [vmem:[#allocation4 + $0x20] sm:$0xff]
        %v665 = vld [vmem:[#allocation4 + $0x28] sm:$0xff]
        %v666 = vld [vmem:[#allocation4 + $0x30] sm:$0xff]
        %v667 = vld [vmem:[#allocation4 + $0x38] sm:$0xff]
        %669 = vset.pattern.permute.xlu0 0
        %670 = vperm.xlu0 %669, %v524
        %v671 = vpop.permute.xlu0 %670
        %674 = vset.pattern.permute.xlu0 0
        %675 = vperm.xlu0 %674, %v526
        %v676 = vpop.permute.xlu0 %675
        %679 = vset.pattern.permute.xlu0 0
        %680 = vperm.xlu0 %679, %v528
        %v681 = vpop.permute.xlu0 %680
        %684 = vset.pattern.permute.xlu0 0
        %685 = vperm.xlu0 %684, %v530
        %v686 = vpop.permute.xlu0 %685
        %689 = vset.pattern.permute.xlu0 0
        %690 = vperm.xlu0 %689, %v532
        %v691 = vpop.permute.xlu0 %690
        %694 = vset.pattern.permute.xlu0 0
        %695 = vperm.xlu0 %694, %v534
        %v696 = vpop.permute.xlu0 %695
        %699 = vset.pattern.permute.xlu0 0
        %700 = vperm.xlu0 %699, %v536
        %v701 = vpop.permute.xlu0 %700
        %704 = vset.pattern.permute.xlu0 0
        %705 = vperm.xlu0 %704, %v538
        %v706 = vpop.permute.xlu0 %705
        %v708 = vmul.f32 %v671, %v660
        %v709 = vmul.f32 %v676, %v661
        %v710 = vmul.f32 %v681, %v662
        %v711 = vmul.f32 %v686, %v663
        %v712 = vmul.f32 %v691, %v664
        %v713 = vmul.f32 %v696, %v665
        %v714 = vmul.f32 %v701, %v666
        %v715 = vmul.f32 %v706, %v667
        %v717 = vsel %vm321, %v588, 0
        %v720 = vsel %vm321, %v590, 0
        %v723 = vsel %vm321, %v592, 0
        %v726 = vsel %vm321, %v594, 0
        %v729 = vsel %vm321, %v596, 0
        %v732 = vsel %vm321, %v598, 0
        %v735 = vsel %vm321, %v600, 0
        %v738 = vsel %vm321, %v602, 0
        %740 = vmatprep.subr.mxu0 0.0
        %741 = vmatpush1.msra.mxu0 0.0
        %742 = vmatprep.subr.mxu0 0.0
        %743 = vmatpush1.msra.mxu0 0.0
        %744 = vmatprep.subr.mxu0 0.0
        %745 = vmatpush1.msra.mxu0 0.0
        %746 = vmatprep.subr.mxu0 0.0
        %747 = vmatpush1.msra.mxu0 0.0
        %748 = vmatprep.subr.mxu0 0.0
        %749 = vmatpush1.msra.mxu0 0.0
        %750 = vmatprep.subr.mxu0 0.0
        %751 = vmatpush1.msra.mxu0 0.0
        %752 = vmatprep.subr.mxu0 0.0
        %753 = vmatpush1.msra.mxu0 0.0
        %754 = vmatprep.subr.mxu0 0.0
        %755 = vmatpush1.msra.mxu0 0.0
        %756 = vmatprep.subr.mxu0 0.0
        %757 = vmatpush1.msra.mxu0 %v304
        %758 = vmatprep.subr.mxu0 0.0
        %759 = vmatpush1.msra.mxu0 %v303
        %760 = vmatprep.subr.mxu0 0.0
        %761 = vmatpush1.msra.mxu0 %v302
        %762 = vmatprep.subr.mxu0 0.0
        %763 = vmatpush1.msra.mxu0 %v301
        %764 = vmatprep.subr.mxu0 0.0
        %765 = vmatpush1.msra.mxu0 %v300
        %766 = vmatprep.subr.mxu0 0.0
        %767 = vmatpush1.msra.mxu0 %v299
        %768 = vmatprep.subr.mxu0 0.0
        %769 = vmatpush1.msra.mxu0 %v298
        %770 = vmatprep.subr.mxu0 0.0
        %771 = vmatpush1.msra.mxu0 %v297
        %772 = vmatprep.subr.mxu0 0.0
        %773 = vmatpush2.msra.mxu0 0.0
        %774 = vmatprep.subr.mxu0 0.0
        %775 = vmatpush2.msra.mxu0 0.0
        %776 = vmatprep.subr.mxu0 0.0
        %777 = vmatpush2.msra.mxu0 0.0
        %778 = vmatprep.subr.mxu0 0.0
        %779 = vmatpush2.msra.mxu0 0.0
        %780 = vmatprep.subr.mxu0 0.0
        %781 = vmatpush2.msra.mxu0 0.0
        %782 = vmatprep.subr.mxu0 0.0
        %783 = vmatpush2.msra.mxu0 0.0
        %784 = vmatprep.subr.mxu0 0.0
        %785 = vmatpush2.msra.mxu0 0.0
        %786 = vmatprep.subr.mxu0 0.0
        %787 = vmatpush2.msra.mxu0 0.0
        %788 = vmatprep.subr.mxu0 0.0
        %789 = vmatpush2.msra.mxu0 0.0
        %790 = vmatprep.subr.mxu0 0.0
        %791 = vmatpush2.msra.mxu0 0.0
        %792 = vmatprep.subr.mxu0 0.0
        %793 = vmatpush2.msra.mxu0 0.0
        %794 = vmatprep.subr.mxu0 0.0
        %795 = vmatpush2.msra.mxu0 0.0
        %796 = vmatprep.subr.mxu0 0.0
        %797 = vmatpush2.msra.mxu0 0.0
        %798 = vmatprep.subr.mxu0 0.0
        %799 = vmatpush2.msra.mxu0 0.0
        %800 = vmatprep.subr.mxu0 0.0
        %801 = vmatpush2.msra.mxu0 0.0
        %802 = vmatprep.subr.mxu0 0.0
        %803 = vmatpush2.msra.mxu0 0.0
        %804 = vmatprep.mubr.f32.mxu0 0.0
        %805 = vmatmul.mubr.f32.gmra.mxu0 %v717
        %v806 = vpop.f32.mrf.mxu0
        %v807 = vadd.f32 0.0, %v806
        %v808 = vpop.f32.mrf.mxu0
        %809 = vmatprep.mubr.f32.mxu0 0.0
        %810 = vmatmul.mubr.f32.gmra.mxu0 %v720
        %v811 = vpop.f32.mrf.mxu0
        %v812 = vadd.f32 0.0, %v811
        %v813 = vpop.f32.mrf.mxu0
        %814 = vmatprep.mubr.f32.mxu0 0.0
        %815 = vmatmul.mubr.f32.gmra.mxu0 %v723
        %v816 = vpop.f32.mrf.mxu0
        %v817 = vadd.f32 0.0, %v816
        %v818 = vpop.f32.mrf.mxu0
        %819 = vmatprep.mubr.f32.mxu0 0.0
        %820 = vmatmul.mubr.f32.gmra.mxu0 %v726
        %v821 = vpop.f32.mrf.mxu0
        %v822 = vadd.f32 0.0, %v821
        %v823 = vpop.f32.mrf.mxu0
        %824 = vmatprep.mubr.f32.mxu0 0.0
        %825 = vmatmul.mubr.f32.gmra.mxu0 %v729
        %v826 = vpop.f32.mrf.mxu0
        %v827 = vadd.f32 0.0, %v826
        %v828 = vpop.f32.mrf.mxu0
        %829 = vmatprep.mubr.f32.mxu0 0.0
        %830 = vmatmul.mubr.f32.gmra.mxu0 %v732
        %v831 = vpop.f32.mrf.mxu0
        %v832 = vadd.f32 0.0, %v831
        %v833 = vpop.f32.mrf.mxu0
        %834 = vmatprep.mubr.f32.mxu0 0.0
        %835 = vmatmul.mubr.f32.gmra.mxu0 %v735
        %v836 = vpop.f32.mrf.mxu0
        %v837 = vadd.f32 0.0, %v836
        %v838 = vpop.f32.mrf.mxu0
        %839 = vmatprep.mubr.f32.mxu0 0.0
        %840 = vmatmul.mubr.f32.gmra.mxu0 %v738
        %v841 = vpop.f32.mrf.mxu0
        %v842 = vadd.f32 0.0, %v841
        %v843 = vpop.f32.mrf.mxu0
        %844 = vdwg.mxu0
        %v845 = vadd.f32 %v708, %v807
        %v846 = vadd.f32 %v709, %v812
        %v847 = vadd.f32 %v710, %v817
        %v848 = vadd.f32 %v711, %v822
        %v849 = vadd.f32 %v712, %v827
        %v850 = vadd.f32 %v713, %v832
        %v851 = vadd.f32 %v714, %v837
        %v852 = vadd.f32 %v715, %v842
        %853 = vst.msk [vmem:[#allocation4] sm:$0xff] %vm321, %v845
        %854 = vst.msk [vmem:[#allocation4 + $0x8] sm:$0xff] %vm321, %v846
        %855 = vst.msk [vmem:[#allocation4 + $0x10] sm:$0xff] %vm321, %v847
        %856 = vst.msk [vmem:[#allocation4 + $0x18] sm:$0xff] %vm321, %v848
        %857 = vst.msk [vmem:[#allocation4 + $0x20] sm:$0xff] %vm321, %v849
        %858 = vst.msk [vmem:[#allocation4 + $0x28] sm:$0xff] %vm321, %v850
        %859 = vst.msk [vmem:[#allocation4 + $0x30] sm:$0xff] %vm321, %v851
        %860 = vst.msk [vmem:[#allocation4 + $0x38] sm:$0xff] %vm321, %v852
        %861 = vst.msk [vmem:[#allocation2] sm:$0xff] %vm651, %v507
        %862 = vst.msk [vmem:[#allocation2 + $0x8] sm:$0xff] %vm651, %v508
        %863 = vst.msk [vmem:[#allocation2 + $0x10] sm:$0xff] %vm651, %v509
        %864 = vst.msk [vmem:[#allocation2 + $0x18] sm:$0xff] %vm651, %v510
        %865 = vst.msk [vmem:[#allocation2 + $0x20] sm:$0xff] %vm651, %v511
        %866 = vst.msk [vmem:[#allocation2 + $0x28] sm:$0xff] %vm651, %v512
        %867 = vst.msk [vmem:[#allocation2 + $0x30] sm:$0xff] %vm651, %v513
        %868 = vst.msk [vmem:[#allocation2 + $0x38] sm:$0xff] %vm651, %v514
        %v869 = vld [vmem:[%s206] sm:$0xff]
        %v870 = vld [vmem:[%s206 + $0x10] sm:$0xff]
        %v871 = vld [vmem:[%s206 + $0x20] sm:$0xff]
        %v872 = vld [vmem:[%s206 + $0x30] sm:$0xff]
        %v873 = vld [vmem:[%s206 + $0x40] sm:$0xff]
        %v874 = vld [vmem:[%s206 + $0x50] sm:$0xff]
        %v875 = vld [vmem:[%s206 + $0x60] sm:$0xff]
        %v876 = vld [vmem:[%s206 + $0x70] sm:$0xff]
        %v877 = vld [vmem:[%s206 + $0x8] sm:$0xff]
        %v878 = vld [vmem:[%s206 + $0x18] sm:$0xff]
        %v879 = vld [vmem:[%s206 + $0x28] sm:$0xff]
        %v880 = vld [vmem:[%s206 + $0x38] sm:$0xff]
        %v881 = vld [vmem:[%s206 + $0x48] sm:$0xff]
        %v882 = vld [vmem:[%s206 + $0x58] sm:$0xff]
        %v883 = vld [vmem:[%s206 + $0x68] sm:$0xff]
        %v884 = vld [vmem:[%s206 + $0x78] sm:$0xff]
        %v885 = vld [vmem:[%s197] sm:$0xff]
        %v886 = vld [vmem:[%s197 + $0x8] sm:$0xff]
        %v887 = vld [vmem:[%s197 + $0x10] sm:$0xff]
        %v888 = vld [vmem:[%s197 + $0x18] sm:$0xff]
        %v889 = vld [vmem:[%s197 + $0x20] sm:$0xff]
        %v890 = vld [vmem:[%s197 + $0x28] sm:$0xff]
        %v891 = vld [vmem:[%s197 + $0x30] sm:$0xff]
        %v892 = vld [vmem:[%s197 + $0x38] sm:$0xff]
        %v893 = vmul.f32 %v885, 0.125
        %v894 = vmul.f32 %v886, 0.125
        %v895 = vmul.f32 %v887, 0.125
        %v896 = vmul.f32 %v888, 0.125
        %v897 = vmul.f32 %v889, 0.125
        %v898 = vmul.f32 %v890, 0.125
        %v899 = vmul.f32 %v891, 0.125
        %v900 = vmul.f32 %v892, 0.125
        %909 = vrot.lane.b32.xlu0 %v893, 64
        %v910 = vpop.permute.xlu0 %909
        %911 = vrot.lane.b32.xlu0 %v894, 64
        %v912 = vpop.permute.xlu0 %911
        %913 = vrot.lane.b32.xlu0 %v895, 64
        %v914 = vpop.permute.xlu0 %913
        %915 = vrot.lane.b32.xlu0 %v896, 64
        %v916 = vpop.permute.xlu0 %915
        %917 = vrot.lane.b32.xlu0 %v897, 64
        %v918 = vpop.permute.xlu0 %917
        %919 = vrot.lane.b32.xlu0 %v898, 64
        %v920 = vpop.permute.xlu0 %919
        %921 = vrot.lane.b32.xlu0 %v899, 64
        %v922 = vpop.permute.xlu0 %921
        %923 = vrot.lane.b32.xlu0 %v900, 64
        %v924 = vpop.permute.xlu0 %923
        %933 = vrot.lane.b32.xlu0 %v869, 64
        %v934 = vpop.permute.xlu0 %933
        %935 = vrot.lane.b32.xlu0 %v870, 64
        %v936 = vpop.permute.xlu0 %935
        %937 = vrot.lane.b32.xlu0 %v871, 64
        %v938 = vpop.permute.xlu0 %937
        %939 = vrot.lane.b32.xlu0 %v872, 64
        %v940 = vpop.permute.xlu0 %939
        %941 = vrot.lane.b32.xlu0 %v873, 64
        %v942 = vpop.permute.xlu0 %941
        %943 = vrot.lane.b32.xlu0 %v874, 64
        %v944 = vpop.permute.xlu0 %943
        %945 = vrot.lane.b32.xlu0 %v875, 64
        %v946 = vpop.permute.xlu0 %945
        %947 = vrot.lane.b32.xlu0 %v876, 64
        %v948 = vpop.permute.xlu0 %947
        %v949 = vsel %vm321, %v910, 0
        %v951 = vsel %vm321, %v912, 0
        %v953 = vsel %vm321, %v914, 0
        %v955 = vsel %vm321, %v916, 0
        %v957 = vsel %vm321, %v918, 0
        %v959 = vsel %vm321, %v920, 0
        %v961 = vsel %vm321, %v922, 0
        %v963 = vsel %vm321, %v924, 0
        %v965 = vsel %vm321, %v934, 0
        %v967 = vsel %vm321, %v936, 0
        %v969 = vsel %vm321, %v938, 0
        %v971 = vsel %vm321, %v940, 0
        %v973 = vsel %vm321, %v942, 0
        %v975 = vsel %vm321, %v944, 0
        %v977 = vsel %vm321, %v946, 0
        %v979 = vsel %vm321, %v948, 0
        %981 = vmatprep.subr.mxu0 0.0
        %982 = vmatpush1.xpose.msra.mxu0 0.0
        %983 = vmatprep.subr.mxu0 0.0
        %984 = vmatpush1.xpose.msra.mxu0 0.0
        %985 = vmatprep.subr.mxu0 0.0
        %986 = vmatpush1.xpose.msra.mxu0 0.0
        %987 = vmatprep.subr.mxu0 0.0
        %988 = vmatpush1.xpose.msra.mxu0 0.0
        %989 = vmatprep.subr.mxu0 0.0
        %990 = vmatpush1.xpose.msra.mxu0 0.0
        %991 = vmatprep.subr.mxu0 0.0
        %992 = vmatpush1.xpose.msra.mxu0 0.0
        %993 = vmatprep.subr.mxu0 0.0
        %994 = vmatpush1.xpose.msra.mxu0 0.0
        %995 = vmatprep.subr.mxu0 0.0
        %996 = vmatpush1.xpose.msra.mxu0 0.0
        %997 = vmatprep.subr.mxu0 0.0
        %998 = vmatpush1.xpose.msra.mxu0 %v979
        %999 = vmatprep.subr.mxu0 0.0
        %1000 = vmatpush1.xpose.msra.mxu0 %v977
        %1001 = vmatprep.subr.mxu0 0.0
        %1002 = vmatpush1.xpose.msra.mxu0 %v975
        %1003 = vmatprep.subr.mxu0 0.0
        %1004 = vmatpush1.xpose.msra.mxu0 %v973
        %1005 = vmatprep.subr.mxu0 0.0
        %1006 = vmatpush1.xpose.msra.mxu0 %v971
        %1007 = vmatprep.subr.mxu0 0.0
        %1008 = vmatpush1.xpose.msra.mxu0 %v969
        %1009 = vmatprep.subr.mxu0 0.0
        %1010 = vmatpush1.xpose.msra.mxu0 %v967
        %1011 = vmatprep.subr.mxu0 0.0
        %1012 = vmatpush1.xpose.msra.mxu0 %v965
        %1013 = vmatprep.subr.mxu0 0.0
        %1014 = vmatpush2.xpose.msra.mxu0 0.0
        %1015 = vmatprep.subr.mxu0 0.0
        %1016 = vmatpush2.xpose.msra.mxu0 0.0
        %1017 = vmatprep.subr.mxu0 0.0
        %1018 = vmatpush2.xpose.msra.mxu0 0.0
        %1019 = vmatprep.subr.mxu0 0.0
        %1020 = vmatpush2.xpose.msra.mxu0 0.0
        %1021 = vmatprep.subr.mxu0 0.0
        %1022 = vmatpush2.xpose.msra.mxu0 0.0
        %1023 = vmatprep.subr.mxu0 0.0
        %1024 = vmatpush2.xpose.msra.mxu0 0.0
        %1025 = vmatprep.subr.mxu0 0.0
        %1026 = vmatpush2.xpose.msra.mxu0 0.0
        %1027 = vmatprep.subr.mxu0 0.0
        %1028 = vmatpush2.xpose.msra.mxu0 0.0
        %1029 = vmatprep.subr.mxu0 0.0
        %1030 = vmatpush2.xpose.msra.mxu0 0.0
        %1031 = vmatprep.subr.mxu0 0.0
        %1032 = vmatpush2.xpose.msra.mxu0 0.0
        %1033 = vmatprep.subr.mxu0 0.0
        %1034 = vmatpush2.xpose.msra.mxu0 0.0
        %1035 = vmatprep.subr.mxu0 0.0
        %1036 = vmatpush2.xpose.msra.mxu0 0.0
        %1037 = vmatprep.subr.mxu0 0.0
        %1038 = vmatpush2.xpose.msra.mxu0 0.0
        %1039 = vmatprep.subr.mxu0 0.0
        %1040 = vmatpush2.xpose.msra.mxu0 0.0
        %1041 = vmatprep.subr.mxu0 0.0
        %1042 = vmatpush2.xpose.msra.mxu0 0.0
        %1043 = vmatprep.subr.mxu0 0.0
        %1044 = vmatpush2.xpose.msra.mxu0 0.0
        %1045 = vmatprep.mubr.f32.mxu0 0.0
        %1046 = vmatmul.mubr.f32.gmra.mxu0 %v949
        %v1047 = vpop.f32.mrf.mxu0
        %v1048 = vadd.f32 0.0, %v1047
        %v1049 = vpop.f32.mrf.mxu0
        %1050 = vmatprep.mubr.f32.mxu0 0.0
        %1051 = vmatmul.mubr.f32.gmra.mxu0 %v951
        %v1052 = vpop.f32.mrf.mxu0
        %v1053 = vadd.f32 0.0, %v1052
        %v1054 = vpop.f32.mrf.mxu0
        %1055 = vmatprep.mubr.f32.mxu0 0.0
        %1056 = vmatmul.mubr.f32.gmra.mxu0 %v953
        %v1057 = vpop.f32.mrf.mxu0
        %v1058 = vadd.f32 0.0, %v1057
        %v1059 = vpop.f32.mrf.mxu0
        %1060 = vmatprep.mubr.f32.mxu0 0.0
        %1061 = vmatmul.mubr.f32.gmra.mxu0 %v955
        %v1062 = vpop.f32.mrf.mxu0
        %v1063 = vadd.f32 0.0, %v1062
        %v1064 = vpop.f32.mrf.mxu0
        %1065 = vmatprep.mubr.f32.mxu0 0.0
        %1066 = vmatmul.mubr.f32.gmra.mxu0 %v957
        %v1067 = vpop.f32.mrf.mxu0
        %v1068 = vadd.f32 0.0, %v1067
        %v1069 = vpop.f32.mrf.mxu0
        %1070 = vmatprep.mubr.f32.mxu0 0.0
        %1071 = vmatmul.mubr.f32.gmra.mxu0 %v959
        %v1072 = vpop.f32.mrf.mxu0
        %v1073 = vadd.f32 0.0, %v1072
        %v1074 = vpop.f32.mrf.mxu0
        %1075 = vmatprep.mubr.f32.mxu0 0.0
        %1076 = vmatmul.mubr.f32.gmra.mxu0 %v961
        %v1077 = vpop.f32.mrf.mxu0
        %v1078 = vadd.f32 0.0, %v1077
        %v1079 = vpop.f32.mrf.mxu0
        %1080 = vmatprep.mubr.f32.mxu0 0.0
        %1081 = vmatmul.mubr.f32.gmra.mxu0 %v963
        %v1082 = vpop.f32.mrf.mxu0
        %v1083 = vadd.f32 0.0, %v1082
        %v1084 = vpop.f32.mrf.mxu0
        %1085 = vdwg.mxu0
        %s1086 = scalar_lea.vmem [#allocation2], 64
        %v1087 = vld [vmem:[%s1086] sm:$0xff]
        %v1088 = vld [vmem:[%s1086 + $0x8] sm:$0xff]
        %v1089 = vld [vmem:[%s1086 + $0x10] sm:$0xff]
        %v1090 = vld [vmem:[%s1086 + $0x18] sm:$0xff]
        %v1091 = vld [vmem:[%s1086 + $0x20] sm:$0xff]
        %v1092 = vld [vmem:[%s1086 + $0x28] sm:$0xff]
        %v1093 = vld [vmem:[%s1086 + $0x30] sm:$0xff]
        %v1094 = vld [vmem:[%s1086 + $0x38] sm:$0xff]
        %v1095 = vsel %vm321, %v1048, -inf
        %1096 = vmax.xlane.f32.xlu0 %v1095
        %v1097 = vpop.xlane.xlu0 %1096
        %v1098 = vsel %vm321, %v1053, -inf
        %1099 = vmax.xlane.f32.xlu0 %v1098
        %v1100 = vpop.xlane.xlu0 %1099
        %v1101 = vsel %vm321, %v1058, -inf
        %1102 = vmax.xlane.f32.xlu0 %v1101
        %v1103 = vpop.xlane.xlu0 %1102
        %v1104 = vsel %vm321, %v1063, -inf
        %1105 = vmax.xlane.f32.xlu0 %v1104
        %v1106 = vpop.xlane.xlu0 %1105
        %v1107 = vsel %vm321, %v1068, -inf
        %1108 = vmax.xlane.f32.xlu0 %v1107
        %v1109 = vpop.xlane.xlu0 %1108
        %v1110 = vsel %vm321, %v1073, -inf
        %1111 = vmax.xlane.f32.xlu0 %v1110
        %v1112 = vpop.xlane.xlu0 %1111
        %v1113 = vsel %vm321, %v1078, -inf
        %1114 = vmax.xlane.f32.xlu0 %v1113
        %v1115 = vpop.xlane.xlu0 %1114
        %v1116 = vsel %vm321, %v1083, -inf
        %1117 = vmax.xlane.f32.xlu0 %v1116
        %v1118 = vpop.xlane.xlu0 %1117
        %v1119 = vmax.f32 %v1087, %v1097
        %v1120 = vmax.f32 %v1088, %v1100
        %v1121 = vmax.f32 %v1089, %v1103
        %v1122 = vmax.f32 %v1090, %v1106
        %v1123 = vmax.f32 %v1091, %v1109
        %v1124 = vmax.f32 %v1092, %v1112
        %v1125 = vmax.f32 %v1093, %v1115
        %v1126 = vmax.f32 %v1094, %v1118
        %v1127 = vsub.f32 %v1087, %v1119
        %v1128 = vsub.f32 %v1088, %v1120
        %v1129 = vsub.f32 %v1089, %v1121
        %v1130 = vsub.f32 %v1090, %v1122
        %v1131 = vsub.f32 %v1091, %v1123
        %v1132 = vsub.f32 %v1092, %v1124
        %v1133 = vsub.f32 %v1093, %v1125
        %v1134 = vsub.f32 %v1094, %v1126
        %v1135 = vmul.f32 %v1127, 1.442695
        %v1136 = vpow.pop %v1135
        %v1137 = vmul.f32 %v1128, 1.442695
        %v1138 = vpow.pop %v1137
        %v1139 = vmul.f32 %v1129, 1.442695
        %v1140 = vpow.pop %v1139
        %v1141 = vmul.f32 %v1130, 1.442695
        %v1142 = vpow.pop %v1141
        %v1143 = vmul.f32 %v1131, 1.442695
        %v1144 = vpow.pop %v1143
        %v1145 = vmul.f32 %v1132, 1.442695
        %v1146 = vpow.pop %v1145
        %v1147 = vmul.f32 %v1133, 1.442695
        %v1148 = vpow.pop %v1147
        %v1149 = vmul.f32 %v1134, 1.442695
        %v1150 = vpow.pop %v1149
        %1152 = vset.pattern.permute.xlu0 0
        %1153 = vperm.xlu0 %1152, %v1119
        %v1154 = vpop.permute.xlu0 %1153
        %1157 = vset.pattern.permute.xlu0 0
        %1158 = vperm.xlu0 %1157, %v1120
        %v1159 = vpop.permute.xlu0 %1158
        %1162 = vset.pattern.permute.xlu0 0
        %1163 = vperm.xlu0 %1162, %v1121
        %v1164 = vpop.permute.xlu0 %1163
        %1167 = vset.pattern.permute.xlu0 0
        %1168 = vperm.xlu0 %1167, %v1122
        %v1169 = vpop.permute.xlu0 %1168
        %1172 = vset.pattern.permute.xlu0 0
        %1173 = vperm.xlu0 %1172, %v1123
        %v1174 = vpop.permute.xlu0 %1173
        %1177 = vset.pattern.permute.xlu0 0
        %1178 = vperm.xlu0 %1177, %v1124
        %v1179 = vpop.permute.xlu0 %1178
        %1182 = vset.pattern.permute.xlu0 0
        %1183 = vperm.xlu0 %1182, %v1125
        %v1184 = vpop.permute.xlu0 %1183
        %1187 = vset.pattern.permute.xlu0 0
        %1188 = vperm.xlu0 %1187, %v1126
        %v1189 = vpop.permute.xlu0 %1188
        %v1191 = vsub.f32 %v1048, %v1154
        %v1192 = vsub.f32 %v1053, %v1159
        %v1193 = vsub.f32 %v1058, %v1164
        %v1194 = vsub.f32 %v1063, %v1169
        %v1195 = vsub.f32 %v1068, %v1174
        %v1196 = vsub.f32 %v1073, %v1179
        %v1197 = vsub.f32 %v1078, %v1184
        %v1198 = vsub.f32 %v1083, %v1189
        %v1199 = vmul.f32 %v1191, 1.442695
        %v1200 = vpow.pop %v1199
        %v1201 = vmul.f32 %v1192, 1.442695
        %v1202 = vpow.pop %v1201
        %v1203 = vmul.f32 %v1193, 1.442695
        %v1204 = vpow.pop %v1203
        %v1205 = vmul.f32 %v1194, 1.442695
        %v1206 = vpow.pop %v1205
        %v1207 = vmul.f32 %v1195, 1.442695
        %v1208 = vpow.pop %v1207
        %v1209 = vmul.f32 %v1196, 1.442695
        %v1210 = vpow.pop %v1209
        %v1211 = vmul.f32 %v1197, 1.442695
        %v1212 = vpow.pop %v1211
        %v1213 = vmul.f32 %v1198, 1.442695
        %v1214 = vpow.pop %v1213
        %s1215 = scalar_lea.vmem [#allocation3], 64
        %v1216 = vld [vmem:[%s1215] sm:$0xff]
        %v1217 = vld [vmem:[%s1215 + $0x8] sm:$0xff]
        %v1218 = vld [vmem:[%s1215 + $0x10] sm:$0xff]
        %v1219 = vld [vmem:[%s1215 + $0x18] sm:$0xff]
        %v1220 = vld [vmem:[%s1215 + $0x20] sm:$0xff]
        %v1221 = vld [vmem:[%s1215 + $0x28] sm:$0xff]
        %v1222 = vld [vmem:[%s1215 + $0x30] sm:$0xff]
        %v1223 = vld [vmem:[%s1215 + $0x38] sm:$0xff]
        %v1224 = vmul.f32 %v1136, %v1216
        %v1225 = vmul.f32 %v1138, %v1217
        %v1226 = vmul.f32 %v1140, %v1218
        %v1227 = vmul.f32 %v1142, %v1219
        %v1228 = vmul.f32 %v1144, %v1220
        %v1229 = vmul.f32 %v1146, %v1221
        %v1230 = vmul.f32 %v1148, %v1222
        %v1231 = vmul.f32 %v1150, %v1223
        %v1232 = vsel %vm321, %v1200, 0.0
        %1233 = vadd.xlane.f32.xlu0 %v1232
        %v1234 = vpop.xlane.xlu0 %1233
        %v1235 = vsel %vm321, %v1202, 0.0
        %1236 = vadd.xlane.f32.xlu0 %v1235
        %v1237 = vpop.xlane.xlu0 %1236
        %v1238 = vsel %vm321, %v1204, 0.0
        %1239 = vadd.xlane.f32.xlu0 %v1238
        %v1240 = vpop.xlane.xlu0 %1239
        %v1241 = vsel %vm321, %v1206, 0.0
        %1242 = vadd.xlane.f32.xlu0 %v1241
        %v1243 = vpop.xlane.xlu0 %1242
        %v1244 = vsel %vm321, %v1208, 0.0
        %1245 = vadd.xlane.f32.xlu0 %v1244
        %v1246 = vpop.xlane.xlu0 %1245
        %v1247 = vsel %vm321, %v1210, 0.0
        %1248 = vadd.xlane.f32.xlu0 %v1247
        %v1249 = vpop.xlane.xlu0 %1248
        %v1250 = vsel %vm321, %v1212, 0.0
        %1251 = vadd.xlane.f32.xlu0 %v1250
        %v1252 = vpop.xlane.xlu0 %1251
        %v1253 = vsel %vm321, %v1214, 0.0
        %1254 = vadd.xlane.f32.xlu0 %v1253
        %v1255 = vpop.xlane.xlu0 %1254
        %v1256 = vadd.f32 %v1224, %v1234
        %v1257 = vadd.f32 %v1225, %v1237
        %v1258 = vadd.f32 %v1226, %v1240
        %v1259 = vadd.f32 %v1227, %v1243
        %v1260 = vadd.f32 %v1228, %v1246
        %v1261 = vadd.f32 %v1229, %v1249
        %v1262 = vadd.f32 %v1230, %v1252
        %v1263 = vadd.f32 %v1231, %v1255
        %1264 = vst.msk [vmem:[%s1215] sm:$0xff] %vm651, %v1256
        %1265 = vst.msk [vmem:[%s1215 + $0x8] sm:$0xff] %vm651, %v1257
        %1266 = vst.msk [vmem:[%s1215 + $0x10] sm:$0xff] %vm651, %v1258
        %1267 = vst.msk [vmem:[%s1215 + $0x18] sm:$0xff] %vm651, %v1259
        %1268 = vst.msk [vmem:[%s1215 + $0x20] sm:$0xff] %vm651, %v1260
        %1269 = vst.msk [vmem:[%s1215 + $0x28] sm:$0xff] %vm651, %v1261
        %1270 = vst.msk [vmem:[%s1215 + $0x30] sm:$0xff] %vm651, %v1262
        %1271 = vst.msk [vmem:[%s1215 + $0x38] sm:$0xff] %vm651, %v1263
        %s1272 = scalar_lea.vmem [#allocation4], 64
        %v1273 = vld [vmem:[%s1272] sm:$0xff]
        %v1274 = vld [vmem:[%s1272 + $0x8] sm:$0xff]
        %v1275 = vld [vmem:[%s1272 + $0x10] sm:$0xff]
        %v1276 = vld [vmem:[%s1272 + $0x18] sm:$0xff]
        %v1277 = vld [vmem:[%s1272 + $0x20] sm:$0xff]
        %v1278 = vld [vmem:[%s1272 + $0x28] sm:$0xff]
        %v1279 = vld [vmem:[%s1272 + $0x30] sm:$0xff]
        %v1280 = vld [vmem:[%s1272 + $0x38] sm:$0xff]
        %1282 = vset.pattern.permute.xlu0 0
        %1283 = vperm.xlu0 %1282, %v1136
        %v1284 = vpop.permute.xlu0 %1283
        %1287 = vset.pattern.permute.xlu0 0
        %1288 = vperm.xlu0 %1287, %v1138
        %v1289 = vpop.permute.xlu0 %1288
        %1292 = vset.pattern.permute.xlu0 0
        %1293 = vperm.xlu0 %1292, %v1140
        %v1294 = vpop.permute.xlu0 %1293
        %1297 = vset.pattern.permute.xlu0 0
        %1298 = vperm.xlu0 %1297, %v1142
        %v1299 = vpop.permute.xlu0 %1298
        %1302 = vset.pattern.permute.xlu0 0
        %1303 = vperm.xlu0 %1302, %v1144
        %v1304 = vpop.permute.xlu0 %1303
        %1307 = vset.pattern.permute.xlu0 0
        %1308 = vperm.xlu0 %1307, %v1146
        %v1309 = vpop.permute.xlu0 %1308
        %1312 = vset.pattern.permute.xlu0 0
        %1313 = vperm.xlu0 %1312, %v1148
        %v1314 = vpop.permute.xlu0 %1313
        %1317 = vset.pattern.permute.xlu0 0
        %1318 = vperm.xlu0 %1317, %v1150
        %v1319 = vpop.permute.xlu0 %1318
        %v1321 = vmul.f32 %v1284, %v1273
        %v1322 = vmul.f32 %v1289, %v1274
        %v1323 = vmul.f32 %v1294, %v1275
        %v1324 = vmul.f32 %v1299, %v1276
        %v1325 = vmul.f32 %v1304, %v1277
        %v1326 = vmul.f32 %v1309, %v1278
        %v1327 = vmul.f32 %v1314, %v1279
        %v1328 = vmul.f32 %v1319, %v1280
        %1337 = vrot.lane.b32.xlu0 %v877, 64
        %v1338 = vpop.permute.xlu0 %1337
        %1339 = vrot.lane.b32.xlu0 %v878, 64
        %v1340 = vpop.permute.xlu0 %1339
        %1341 = vrot.lane.b32.xlu0 %v879, 64
        %v1342 = vpop.permute.xlu0 %1341
        %1343 = vrot.lane.b32.xlu0 %v880, 64
        %v1344 = vpop.permute.xlu0 %1343
        %1345 = vrot.lane.b32.xlu0 %v881, 64
        %v1346 = vpop.permute.xlu0 %1345
        %1347 = vrot.lane.b32.xlu0 %v882, 64
        %v1348 = vpop.permute.xlu0 %1347
        %1349 = vrot.lane.b32.xlu0 %v883, 64
        %v1350 = vpop.permute.xlu0 %1349
        %1351 = vrot.lane.b32.xlu0 %v884, 64
        %v1352 = vpop.permute.xlu0 %1351
        %v1362 = vsel %vm321, %v1200, 0
        %v1365 = vsel %vm321, %v1202, 0
        %v1368 = vsel %vm321, %v1204, 0
        %v1371 = vsel %vm321, %v1206, 0
        %v1374 = vsel %vm321, %v1208, 0
        %v1377 = vsel %vm321, %v1210, 0
        %v1380 = vsel %vm321, %v1212, 0
        %v1383 = vsel %vm321, %v1214, 0
        %1385 = vmatprep.subr.mxu0 0.0
        %1386 = vmatpush1.msra.mxu0 0.0
        %1387 = vmatprep.subr.mxu0 0.0
        %1388 = vmatpush1.msra.mxu0 0.0
        %1389 = vmatprep.subr.mxu0 0.0
        %1390 = vmatpush1.msra.mxu0 0.0
        %1391 = vmatprep.subr.mxu0 0.0
        %1392 = vmatpush1.msra.mxu0 0.0
        %1393 = vmatprep.subr.mxu0 0.0
        %1394 = vmatpush1.msra.mxu0 0.0
        %1395 = vmatprep.subr.mxu0 0.0
        %1396 = vmatpush1.msra.mxu0 0.0
        %1397 = vmatprep.subr.mxu0 0.0
        %1398 = vmatpush1.msra.mxu0 0.0
        %1399 = vmatprep.subr.mxu0 0.0
        %1400 = vmatpush1.msra.mxu0 0.0
        %1401 = vmatprep.subr.mxu0 0.0
        %1402 = vmatpush1.msra.mxu0 %v1352
        %1403 = vmatprep.subr.mxu0 0.0
        %1404 = vmatpush1.msra.mxu0 %v1350
        %1405 = vmatprep.subr.mxu0 0.0
        %1406 = vmatpush1.msra.mxu0 %v1348
        %1407 = vmatprep.subr.mxu0 0.0
        %1408 = vmatpush1.msra.mxu0 %v1346
        %1409 = vmatprep.subr.mxu0 0.0
        %1410 = vmatpush1.msra.mxu0 %v1344
        %1411 = vmatprep.subr.mxu0 0.0
        %1412 = vmatpush1.msra.mxu0 %v1342
        %1413 = vmatprep.subr.mxu0 0.0
        %1414 = vmatpush1.msra.mxu0 %v1340
        %1415 = vmatprep.subr.mxu0 0.0
        %1416 = vmatpush1.msra.mxu0 %v1338
        %1417 = vmatprep.subr.mxu0 0.0
        %1418 = vmatpush2.msra.mxu0 0.0
        %1419 = vmatprep.subr.mxu0 0.0
        %1420 = vmatpush2.msra.mxu0 0.0
        %1421 = vmatprep.subr.mxu0 0.0
        %1422 = vmatpush2.msra.mxu0 0.0
        %1423 = vmatprep.subr.mxu0 0.0
        %1424 = vmatpush2.msra.mxu0 0.0
        %1425 = vmatprep.subr.mxu0 0.0
        %1426 = vmatpush2.msra.mxu0 0.0
        %1427 = vmatprep.subr.mxu0 0.0
        %1428 = vmatpush2.msra.mxu0 0.0
        %1429 = vmatprep.subr.mxu0 0.0
        %1430 = vmatpush2.msra.mxu0 0.0
        %1431 = vmatprep.subr.mxu0 0.0
        %1432 = vmatpush2.msra.mxu0 0.0
        %1433 = vmatprep.subr.mxu0 0.0
        %1434 = vmatpush2.msra.mxu0 0.0
        %1435 = vmatprep.subr.mxu0 0.0
        %1436 = vmatpush2.msra.mxu0 0.0
        %1437 = vmatprep.subr.mxu0 0.0
        %1438 = vmatpush2.msra.mxu0 0.0
        %1439 = vmatprep.subr.mxu0 0.0
        %1440 = vmatpush2.msra.mxu0 0.0
        %1441 = vmatprep.subr.mxu0 0.0
        %1442 = vmatpush2.msra.mxu0 0.0
        %1443 = vmatprep.subr.mxu0 0.0
        %1444 = vmatpush2.msra.mxu0 0.0
        %1445 = vmatprep.subr.mxu0 0.0
        %1446 = vmatpush2.msra.mxu0 0.0
        %1447 = vmatprep.subr.mxu0 0.0
        %1448 = vmatpush2.msra.mxu0 0.0
        %1449 = vmatprep.mubr.f32.mxu0 0.0
        %1450 = vmatmul.mubr.f32.gmra.mxu0 %v1362
        %v1451 = vpop.f32.mrf.mxu0
        %v1452 = vadd.f32 0.0, %v1451
        %v1453 = vpop.f32.mrf.mxu0
        %1454 = vmatprep.mubr.f32.mxu0 0.0
        %1455 = vmatmul.mubr.f32.gmra.mxu0 %v1365
        %v1456 = vpop.f32.mrf.mxu0
        %v1457 = vadd.f32 0.0, %v1456
        %v1458 = vpop.f32.mrf.mxu0
        %1459 = vmatprep.mubr.f32.mxu0 0.0
        %1460 = vmatmul.mubr.f32.gmra.mxu0 %v1368
        %v1461 = vpop.f32.mrf.mxu0
        %v1462 = vadd.f32 0.0, %v1461
        %v1463 = vpop.f32.mrf.mxu0
        %1464 = vmatprep.mubr.f32.mxu0 0.0
        %1465 = vmatmul.mubr.f32.gmra.mxu0 %v1371
        %v1466 = vpop.f32.mrf.mxu0
        %v1467 = vadd.f32 0.0, %v1466
        %v1468 = vpop.f32.mrf.mxu0
        %1469 = vmatprep.mubr.f32.mxu0 0.0
        %1470 = vmatmul.mubr.f32.gmra.mxu0 %v1374
        %v1471 = vpop.f32.mrf.mxu0
        %v1472 = vadd.f32 0.0, %v1471
        %v1473 = vpop.f32.mrf.mxu0
        %1474 = vmatprep.mubr.f32.mxu0 0.0
        %1475 = vmatmul.mubr.f32.gmra.mxu0 %v1377
        %v1476 = vpop.f32.mrf.mxu0
        %v1477 = vadd.f32 0.0, %v1476
        %v1478 = vpop.f32.mrf.mxu0
        %1479 = vmatprep.mubr.f32.mxu0 0.0
        %1480 = vmatmul.mubr.f32.gmra.mxu0 %v1380
        %v1481 = vpop.f32.mrf.mxu0
        %v1482 = vadd.f32 0.0, %v1481
        %v1483 = vpop.f32.mrf.mxu0
        %1484 = vmatprep.mubr.f32.mxu0 0.0
        %1485 = vmatmul.mubr.f32.gmra.mxu0 %v1383
        %v1486 = vpop.f32.mrf.mxu0
        %v1487 = vadd.f32 0.0, %v1486
        %v1488 = vpop.f32.mrf.mxu0
        %1489 = vdwg.mxu0
        %v1490 = vadd.f32 %v1321, %v1452
        %v1491 = vadd.f32 %v1322, %v1457
        %v1492 = vadd.f32 %v1323, %v1462
        %v1493 = vadd.f32 %v1324, %v1467
        %v1494 = vadd.f32 %v1325, %v1472
        %v1495 = vadd.f32 %v1326, %v1477
        %v1496 = vadd.f32 %v1327, %v1482
        %v1497 = vadd.f32 %v1328, %v1487
        %1498 = vst.msk [vmem:[%s1272] sm:$0xff] %vm321, %v1490
        %1499 = vst.msk [vmem:[%s1272 + $0x8] sm:$0xff] %vm321, %v1491
        %1500 = vst.msk [vmem:[%s1272 + $0x10] sm:$0xff] %vm321, %v1492
        %1501 = vst.msk [vmem:[%s1272 + $0x18] sm:$0xff] %vm321, %v1493
        %1502 = vst.msk [vmem:[%s1272 + $0x20] sm:$0xff] %vm321, %v1494
        %1503 = vst.msk [vmem:[%s1272 + $0x28] sm:$0xff] %vm321, %v1495
        %1504 = vst.msk [vmem:[%s1272 + $0x30] sm:$0xff] %vm321, %v1496
        %1505 = vst.msk [vmem:[%s1272 + $0x38] sm:$0xff] %vm321, %v1497
        %1506 = vst.msk [vmem:[%s1086] sm:$0xff] %vm651, %v1119
        %1507 = vst.msk [vmem:[%s1086 + $0x8] sm:$0xff] %vm651, %v1120
        %1508 = vst.msk [vmem:[%s1086 + $0x10] sm:$0xff] %vm651, %v1121
        %1509 = vst.msk [vmem:[%s1086 + $0x18] sm:$0xff] %vm651, %v1122
        %1510 = vst.msk [vmem:[%s1086 + $0x20] sm:$0xff] %vm651, %v1123
        %1511 = vst.msk [vmem:[%s1086 + $0x28] sm:$0xff] %vm651, %v1124
        %1512 = vst.msk [vmem:[%s1086 + $0x30] sm:$0xff] %vm651, %v1125
        %1513 = vst.msk [vmem:[%s1086 + $0x38] sm:$0xff] %vm651, %v1126
        %p1514 = scmp.eq.s32.totalorder %s29, 1
        // Predicated region
        $region41: #{tpu_custom_call.1} parent=27 // pred_check
          %p1515 = pneg %p1514
        $region42: #{tpu_custom_call.1} parent=27 // pred_check_branch
          %1517 = sbr.rel (%p1515) target = $region44
        $region43: #{tpu_custom_call.1} parent=27 // pred_region
          %v1518 = vld [vmem:[#allocation3] sm:$0xff]
          %v1519 = vld [vmem:[#allocation3 + $0x8] sm:$0xff]
          %v1520 = vld [vmem:[#allocation3 + $0x10] sm:$0xff]
          %v1521 = vld [vmem:[#allocation3 + $0x18] sm:$0xff]
          %v1522 = vld [vmem:[#allocation3 + $0x20] sm:$0xff]
          %v1523 = vld [vmem:[#allocation3 + $0x28] sm:$0xff]
          %v1524 = vld [vmem:[#allocation3 + $0x30] sm:$0xff]
          %v1525 = vld [vmem:[#allocation3 + $0x38] sm:$0xff]
          %v1526 = vrcp.pop %v1518
          %v1527 = vrcp.pop %v1519
          %v1528 = vrcp.pop %v1520
          %v1529 = vrcp.pop %v1521
          %v1530 = vrcp.pop %v1522
          %v1531 = vrcp.pop %v1523
          %v1532 = vrcp.pop %v1524
          %v1533 = vrcp.pop %v1525
          %v1534 = vmul.f32 %v1518, %v1526
          %v1535 = vmul.f32 %v1519, %v1527
          %v1536 = vmul.f32 %v1520, %v1528
          %v1537 = vmul.f32 %v1521, %v1529
          %v1538 = vmul.f32 %v1522, %v1530
          %v1539 = vmul.f32 %v1523, %v1531
          %v1540 = vmul.f32 %v1524, %v1532
          %v1541 = vmul.f32 %v1525, %v1533
          %v1542 = vsub.f32 2.0, %v1534
          %v1543 = vsub.f32 2.0, %v1535
          %v1544 = vsub.f32 2.0, %v1536
          %v1545 = vsub.f32 2.0, %v1537
          %v1546 = vsub.f32 2.0, %v1538
          %v1547 = vsub.f32 2.0, %v1539
          %v1548 = vsub.f32 2.0, %v1540
          %v1549 = vsub.f32 2.0, %v1541
          %v1550 = vmul.f32 %v1526, %v1542
          %v1551 = vmul.f32 %v1527, %v1543
          %v1552 = vmul.f32 %v1528, %v1544
          %v1553 = vmul.f32 %v1529, %v1545
          %v1554 = vmul.f32 %v1530, %v1546
          %v1555 = vmul.f32 %v1531, %v1547
          %v1556 = vmul.f32 %v1532, %v1548
          %v1557 = vmul.f32 %v1533, %v1549
          %v1558 = vld [vmem:[#allocation4] sm:$0xff]
          %v1559 = vld [vmem:[#allocation4 + $0x8] sm:$0xff]
          %v1560 = vld [vmem:[#allocation4 + $0x10] sm:$0xff]
          %v1561 = vld [vmem:[#allocation4 + $0x18] sm:$0xff]
          %v1562 = vld [vmem:[#allocation4 + $0x20] sm:$0xff]
          %v1563 = vld [vmem:[#allocation4 + $0x28] sm:$0xff]
          %v1564 = vld [vmem:[#allocation4 + $0x30] sm:$0xff]
          %v1565 = vld [vmem:[#allocation4 + $0x38] sm:$0xff]
          %1567 = vset.pattern.permute.xlu0 0
          %1568 = vperm.xlu0 %1567, %v1550
          %v1569 = vpop.permute.xlu0 %1568
          %1572 = vset.pattern.permute.xlu0 0
          %1573 = vperm.xlu0 %1572, %v1551
          %v1574 = vpop.permute.xlu0 %1573
          %1577 = vset.pattern.permute.xlu0 0
          %1578 = vperm.xlu0 %1577, %v1552
          %v1579 = vpop.permute.xlu0 %1578
          %1582 = vset.pattern.permute.xlu0 0
          %1583 = vperm.xlu0 %1582, %v1553
          %v1584 = vpop.permute.xlu0 %1583
          %1587 = vset.pattern.permute.xlu0 0
          %1588 = vperm.xlu0 %1587, %v1554
          %v1589 = vpop.permute.xlu0 %1588
          %1592 = vset.pattern.permute.xlu0 0
          %1593 = vperm.xlu0 %1592, %v1555
          %v1594 = vpop.permute.xlu0 %1593
          %1597 = vset.pattern.permute.xlu0 0
          %1598 = vperm.xlu0 %1597, %v1556
          %v1599 = vpop.permute.xlu0 %1598
          %1602 = vset.pattern.permute.xlu0 0
          %1603 = vperm.xlu0 %1602, %v1557
          %v1604 = vpop.permute.xlu0 %1603
          %v1606 = vmul.f32 %v1558, %v1569
          %v1607 = vmul.f32 %v1559, %v1574
          %v1608 = vmul.f32 %v1560, %v1579
          %v1609 = vmul.f32 %v1561, %v1584
          %v1610 = vmul.f32 %v1562, %v1589
          %v1611 = vmul.f32 %v1563, %v1594
          %v1612 = vmul.f32 %v1564, %v1599
          %v1613 = vmul.f32 %v1565, %v1604
          %1614 = vst.msk [vmem:[%s231] sm:$0xff] %vm321, %v1606
          %1615 = vst.msk [vmem:[%s231 + $0x8] sm:$0xff] %vm321, %v1607
          %1616 = vst.msk [vmem:[%s231 + $0x10] sm:$0xff] %vm321, %v1608
          %1617 = vst.msk [vmem:[%s231 + $0x18] sm:$0xff] %vm321, %v1609
          %1618 = vst.msk [vmem:[%s231 + $0x20] sm:$0xff] %vm321, %v1610
          %1619 = vst.msk [vmem:[%s231 + $0x28] sm:$0xff] %vm321, %v1611
          %1620 = vst.msk [vmem:[%s231 + $0x30] sm:$0xff] %vm321, %v1612
          %1621 = vst.msk [vmem:[%s231 + $0x38] sm:$0xff] %vm321, %v1613
          %v1622 = vld [vmem:[%s1215] sm:$0xff]
          %v1623 = vld [vmem:[%s1215 + $0x8] sm:$0xff]
          %v1624 = vld [vmem:[%s1215 + $0x10] sm:$0xff]
          %v1625 = vld [vmem:[%s1215 + $0x18] sm:$0xff]
          %v1626 = vld [vmem:[%s1215 + $0x20] sm:$0xff]
          %v1627 = vld [vmem:[%s1215 + $0x28] sm:$0xff]
          %v1628 = vld [vmem:[%s1215 + $0x30] sm:$0xff]
          %v1629 = vld [vmem:[%s1215 + $0x38] sm:$0xff]
          %v1630 = vrcp.pop %v1622
          %v1631 = vrcp.pop %v1623
          %v1632 = vrcp.pop %v1624
          %v1633 = vrcp.pop %v1625
          %v1634 = vrcp.pop %v1626
          %v1635 = vrcp.pop %v1627
          %v1636 = vrcp.pop %v1628
          %v1637 = vrcp.pop %v1629
          %v1638 = vmul.f32 %v1622, %v1630
          %v1639 = vmul.f32 %v1623, %v1631
          %v1640 = vmul.f32 %v1624, %v1632
          %v1641 = vmul.f32 %v1625, %v1633
          %v1642 = vmul.f32 %v1626, %v1634
          %v1643 = vmul.f32 %v1627, %v1635
          %v1644 = vmul.f32 %v1628, %v1636
          %v1645 = vmul.f32 %v1629, %v1637
          %v1646 = vsub.f32 2.0, %v1638
          %v1647 = vsub.f32 2.0, %v1639
          %v1648 = vsub.f32 2.0, %v1640
          %v1649 = vsub.f32 2.0, %v1641
          %v1650 = vsub.f32 2.0, %v1642
          %v1651 = vsub.f32 2.0, %v1643
          %v1652 = vsub.f32 2.0, %v1644
          %v1653 = vsub.f32 2.0, %v1645
          %v1654 = vmul.f32 %v1630, %v1646
          %v1655 = vmul.f32 %v1631, %v1647
          %v1656 = vmul.f32 %v1632, %v1648
          %v1657 = vmul.f32 %v1633, %v1649
          %v1658 = vmul.f32 %v1634, %v1650
          %v1659 = vmul.f32 %v1635, %v1651
          %v1660 = vmul.f32 %v1636, %v1652
          %v1661 = vmul.f32 %v1637, %v1653
          %v1662 = vld [vmem:[%s1272] sm:$0xff]
          %v1663 = vld [vmem:[%s1272 + $0x8] sm:$0xff]
          %v1664 = vld [vmem:[%s1272 + $0x10] sm:$0xff]
          %v1665 = vld [vmem:[%s1272 + $0x18] sm:$0xff]
          %v1666 = vld [vmem:[%s1272 + $0x20] sm:$0xff]
          %v1667 = vld [vmem:[%s1272 + $0x28] sm:$0xff]
          %v1668 = vld [vmem:[%s1272 + $0x30] sm:$0xff]
          %v1669 = vld [vmem:[%s1272 + $0x38] sm:$0xff]
          %1671 = vset.pattern.permute.xlu0 0
          %1672 = vperm.xlu0 %1671, %v1654
          %v1673 = vpop.permute.xlu0 %1672
          %1676 = vset.pattern.permute.xlu0 0
          %1677 = vperm.xlu0 %1676, %v1655
          %v1678 = vpop.permute.xlu0 %1677
          %1681 = vset.pattern.permute.xlu0 0
          %1682 = vperm.xlu0 %1681, %v1656
          %v1683 = vpop.permute.xlu0 %1682
          %1686 = vset.pattern.permute.xlu0 0
          %1687 = vperm.xlu0 %1686, %v1657
          %v1688 = vpop.permute.xlu0 %1687
          %1691 = vset.pattern.permute.xlu0 0
          %1692 = vperm.xlu0 %1691, %v1658
          %v1693 = vpop.permute.xlu0 %1692
          %1696 = vset.pattern.permute.xlu0 0
          %1697 = vperm.xlu0 %1696, %v1659
          %v1698 = vpop.permute.xlu0 %1697
          %1701 = vset.pattern.permute.xlu0 0
          %1702 = vperm.xlu0 %1701, %v1660
          %v1703 = vpop.permute.xlu0 %1702
          %1706 = vset.pattern.permute.xlu0 0
          %1707 = vperm.xlu0 %1706, %v1661
          %v1708 = vpop.permute.xlu0 %1707
          %v1710 = vmul.f32 %v1662, %v1673
          %v1711 = vmul.f32 %v1663, %v1678
          %v1712 = vmul.f32 %v1664, %v1683
          %v1713 = vmul.f32 %v1665, %v1688
          %v1714 = vmul.f32 %v1666, %v1693
          %v1715 = vmul.f32 %v1667, %v1698
          %v1716 = vmul.f32 %v1668, %v1703
          %v1717 = vmul.f32 %v1669, %v1708
          %1726 = vrot.lane.b32.xlu0 %v1710, 64
          %v1727 = vpop.permute.xlu0 %1726
          %1728 = vrot.lane.b32.xlu0 %v1711, 64
          %v1729 = vpop.permute.xlu0 %1728
          %1730 = vrot.lane.b32.xlu0 %v1712, 64
          %v1731 = vpop.permute.xlu0 %1730
          %1732 = vrot.lane.b32.xlu0 %v1713, 64
          %v1733 = vpop.permute.xlu0 %1732
          %1734 = vrot.lane.b32.xlu0 %v1714, 64
          %v1735 = vpop.permute.xlu0 %1734
          %1736 = vrot.lane.b32.xlu0 %v1715, 64
          %v1737 = vpop.permute.xlu0 %1736
          %1738 = vrot.lane.b32.xlu0 %v1716, 64
          %v1739 = vpop.permute.xlu0 %1738
          %1740 = vrot.lane.b32.xlu0 %v1717, 64
          %v1741 = vpop.permute.xlu0 %1740
          %vm1750 = vcmask 1048064
          %1751 = vst.msk [vmem:[%s231] sm:$0xff] %vm1750, %v1727
          %1752 = vst.msk [vmem:[%s231 + $0x8] sm:$0xff] %vm1750, %v1729
          %1753 = vst.msk [vmem:[%s231 + $0x10] sm:$0xff] %vm1750, %v1731
          %1754 = vst.msk [vmem:[%s231 + $0x18] sm:$0xff] %vm1750, %v1733
          %1755 = vst.msk [vmem:[%s231 + $0x20] sm:$0xff] %vm1750, %v1735
          %1756 = vst.msk [vmem:[%s231 + $0x28] sm:$0xff] %vm1750, %v1737
          %1757 = vst.msk [vmem:[%s231 + $0x30] sm:$0xff] %vm1750, %v1739
          %1758 = vst.msk [vmem:[%s231 + $0x38] sm:$0xff] %vm1750, %v1741
        $region44: #{tpu_custom_call.1} parent=27 // pred_fallthru
          _
        %s1759 = sand.u32 %s107, 1
        %s1760 = scalar_lea.sflag [#allocation7], %s1759
        %s1761 = sand.u32 %s107, 1
        %s1762 = smul.addr %s1761, 64
        %s1763 = scalar_lea.vmem [#allocation10], %s1762
        // Predicated region
        $region45: #{tpu_custom_call.1} parent=27 // pred_check
          %p1764 = pneg %p117
        $region46: #{tpu_custom_call.1} parent=27 // pred_check_branch
          %1766 = sbr.rel (%p1764) target = $region48
        $region47: #{tpu_custom_call.1} parent=27 // pred_region
          %s1767 = smul.u32 8, %s28
          %s1769 = ssub.s32 1024, 1024
          %1770 = vsyncadd %s1760, %s1769
          %s1771 = smul.addr %s27, 16
          %s1772 = sadd.s32 %s1767, %s1771
          %s1773 = smul.addr %s1772, 128
          %s1774 = scalar_lea.hbm %s2, %s1773
          %s1775 = sshll.u32 %s1763, 4
          %s1776 = int_to_ptr.vmem [resolvable:$true] %s1775
          %1781 = dma.vmem_to_hbm [thread:$0]  %s1776, 1024, %s1774, %s1760, 128, 128, 8
        $region48: #{tpu_custom_call.1} parent=27 // pred_fallthru
          _
      $region28: #{tpu_custom_call.1} parent=5 // pred_fallthru
        _
      %p1782 = scmp.le.s32.totalorder 2, %s17
      // Predicated region
      $region49: #{tpu_custom_call.1} parent=5 // pred_check
        %p1783 = pneg %p1782
      $region50: #{tpu_custom_call.1} parent=5 // pred_check_branch
        %1785 = sbr.rel (%p1783) target = $region52
      $region51: #{tpu_custom_call.1} parent=5 // pred_region
        %s1786 = ssub.s32 %s17, 2
        // Predicated region
        $region53: #{tpu_custom_call.1} parent=51 // pred_check
          %p1787 = pneg %p123
        $region54: #{tpu_custom_call.1} parent=51 // pred_check_branch
          %1789 = sbr.rel (%p1787) target = $region56
        $region55: #{tpu_custom_call.1} parent=51 // pred_region
          %s1790 = sand.u32 %s108, 1
          %s1791 = scalar_lea.sflag [#allocation7], %s1790
          %s1792 = sand.u32 %s108, 1
          %s1793 = smul.addr %s1792, 64
          %s1794 = scalar_lea.vmem [#allocation10], %s1793
          %1795 = dma.done %s1791, 1024
        $region56: #{tpu_custom_call.1} parent=51 // pred_fallthru
          _
      $region52: #{tpu_custom_call.1} parent=5 // pred_fallthru
        _
    $region6: #{tpu_custom_call.1} parent=1 // loop_footer
      %s21 = sadd.s32 1, %s17
    $region7: #{tpu_custom_call.1} parent=1 // loop_footer_branch
      %16 = sbr.rel target = $region3
    $region8: #{tpu_custom_call.1} parent=1 // loop_exit
      _
    %1796 = vsyncpa [#allocation6], 1
    %s1797 = scalar_lea.sflag [#allocation6], 1
    %1798 = vsyncpa %s1797, 1
    %1799 = vsyncpa [#allocation9], 1
    %s1800 = scalar_lea.sflag [#allocation9], 1
    %1801 = vsyncpa %s1800, 1
    %1802 = vsyncpa [#allocation7], 1
    %s1803 = scalar_lea.sflag [#allocation7], 1
    %1804 = vsyncpa %s1803, 1

</llo_original>
